<compile_context>
chip_gen: v7x
topology: tpu7x:2x2x1
jax: 0.10.0
libtpu: 0.0.40
codegen_flags: <defaults>
</compile_context>

<pallas_src>
import math
import jax
import jax.numpy as jnp
from jax.experimental import pallas as pl
from jax.experimental.pallas import tpu as pltpu

# ---- problem sizes (small, consistent with the module) ----
B, S, D = 2, 8, 32          # batch, seq, d_model
HQ, HKV = 4, 2              # q_n_heads, kv_n_heads
HD = D // HQ                # head_dim = 8
DKV = HD * HKV              # kv projection width = 16
FF = 64                     # feed_forward_dim
N_REP = HQ // HKV
EPS = 1e-5


def _layer_norm(v, w, b):
    mu = jnp.mean(v, axis=-1, keepdims=True)
    var = jnp.mean((v - mu) ** 2, axis=-1, keepdims=True)
    return (v - mu) * jax.lax.rsqrt(var + EPS) * w + b


def encoder_layer_kernel(x_ref, ln_ref, wqkv_ref, bqkv_ref, wo_ref, bo_ref,
                         wgu_ref, wd_ref, biasmask_ref,
                         out_ref, attnw_ref, ctx_ref):
    x = x_ref[...]                                   # (B, S, D)
    xf = x.reshape(B * S, D)                         # flatten batch+seq for dense parts
    ln = ln_ref[...]                                 # (4, D): ln1w, ln1b, ln2w, ln2b

    # ---- pre-norm 1 + fused Q|K|V projection (K/V pre-repeated for GQA) ----
    a = _layer_norm(xf, ln[0:1, :], ln[1:2, :])
    qkv = (jnp.dot(a, wqkv_ref[...], preferred_element_type=jnp.float32)
           + bqkv_ref[...])                          # (B*S, 3D)
    q = qkv[:, 0 * D:1 * D].reshape(B, S, D)
    k = qkv[:, 1 * D:2 * D].reshape(B, S, D)
    v = qkv[:, 2 * D:3 * D].reshape(B, S, D)

    scale = 1.0 / math.sqrt(HD)
    biasmask = biasmask_ref[...]                     # (HQ, S, S) additive alibi + causal

    attn_ps = []
    for h in range(HQ):                              # static unroll over query heads
        sl = slice(h * HD, (h + 1) * HD)
        qh, kh, vh = q[:, :, sl], k[:, :, sl], v[:, :, sl]          # (B, S, HD)
        s = jnp.einsum('bqd,bkd->bqk', qh, kh,
                       preferred_element_type=jnp.float32) * scale  # (B, S, S)
        s = s + biasmask[h]                                         # bias + causal mask
        s = s - jnp.max(s, axis=-1, keepdims=True)                  # stable softmax
        p = jnp.exp(s)
        p = p * pl.reciprocal(jnp.sum(p, axis=-1, keepdims=True), approx=True)
        attn_ps.append(p)
        ctx_ref[:, :, sl] = jnp.einsum('bqk,bkd->bqd', p, vh,
                                       preferred_element_type=jnp.float32)
    attnw_ref[...] = jnp.stack(attn_ps, axis=1)      # (B, HQ, S, S), one batched store

    ctx = ctx_ref[...].reshape(B * S, D)             # 'b h s d -> b s (h d)'
    attn_out = (jnp.dot(ctx, wo_ref[...], preferred_element_type=jnp.float32)
                + bo_ref[...])
    x1 = xf + attn_out                               # residual 1

    # ---- pre-norm 2 + LlamaMLP with fused gate|up (lane-dense 128-wide) ----
    m = _layer_norm(x1, ln[2:3, :], ln[3:4, :])
    gu = jnp.dot(m, wgu_ref[...], preferred_element_type=jnp.float32)   # (B*S, 2*FF)
    g = gu[:, :FF]
    u = gu[:, FF:]
    g = g * jax.nn.sigmoid(g)                        # SiLU
    ffn = jnp.dot(g * u, wd_ref[...], preferred_element_type=jnp.float32)
    out_ref[...] = (x1 + ffn).reshape(B, S, D)       # residual 2


def pack_params(params, attn_bias2d):
    """Pack 15 small params + bias into 8 slabs; fold GQA repeat into K/V columns."""
    ln_slab = jnp.concatenate([params['ln1w'], params['ln1b'],
                               params['ln2w'], params['ln2b']], axis=0)      # (4, D)
    wk_full = jnp.repeat(params['wk'].reshape(D, HKV, HD), N_REP, axis=1).reshape(D, D)
    wv_full = jnp.repeat(params['wv'].reshape(D, HKV, HD), N_REP, axis=1).reshape(D, D)
    bk_full = jnp.repeat(params['bk'].reshape(1, HKV, HD), N_REP, axis=1).reshape(1, D)
    bv_full = jnp.repeat(params['bv'].reshape(1, HKV, HD), N_REP, axis=1).reshape(1, D)
    wqkv = jnp.concatenate([params['wq'], wk_full, wv_full], axis=1)         # (D, 3D)
    bqkv = jnp.concatenate([params['bq'], bk_full, bv_full], axis=1)         # (1, 3D)
    wgu = jnp.concatenate([params['wg'], params['wu']], axis=1)              # (D, 2FF)
    # combined additive alibi + causal mask (masked positions get finfo(f32).min)
    min_val = float(jnp.finfo(jnp.float32).min)
    causal = jnp.triu(jnp.ones((S, S), dtype=bool), k=1)
    biasmask = jnp.where(causal[None, :, :], min_val,
                         attn_bias2d[:, None, :]).astype(jnp.float32)        # (HQ, S, S)
    return (ln_slab, wqkv, bqkv, params['wo'], params['bo'], wgu,
            params['wd'], biasmask)


def transformer_encoder_layer(x, params, attn_bias2d):
    packed = pack_params(params, attn_bias2d)

    def full_spec(arr):
        nd = arr.ndim
        return pl.BlockSpec(arr.shape, lambda i, _nd=nd: (0,) * _nd)

    in_specs = [full_spec(x)] + [full_spec(a) for a in packed]
    out_specs = [pl.BlockSpec((B, S, D), lambda i: (0, 0, 0)),
                 pl.BlockSpec((B, HQ, S, S), lambda i: (0, 0, 0, 0))]
    out_shape = (jax.ShapeDtypeStruct((B, S, D), jnp.float32),
                 jax.ShapeDtypeStruct((B, HQ, S, S), jnp.float32))

    return pl.pallas_call(
        encoder_layer_kernel,
        out_shape=out_shape,
        grid_spec=pltpu.PrefetchScalarGridSpec(
            num_scalar_prefetch=0,
            grid=(1,),                               # single grid step: B folded in
            in_specs=in_specs,
            out_specs=out_specs,
            scratch_shapes=[pltpu.VMEM((B, S, D), jnp.float32)]),
        compiler_params=pltpu.CompilerParams(
            dimension_semantics=("arbitrary",)),
    )(x, *packed)


def reference(x, p, attn_bias4d):
    """Pure-JAX re-implementation of the PyTorch forward (pre-norm, eval)."""
    def ln(v, w, b):
        mu = v.mean(-1, keepdims=True)
        var = ((v - mu) ** 2).mean(-1, keepdims=True)
        return (v - mu) / jnp.sqrt(var + EPS) * w + b

    a = ln(x, p['ln1w'], p['ln1b'])
    q = a @ p['wq'] + p['bq']
    k = a @ p['wk'] + p['bk']
    v = a @ p['wv'] + p['bv']
    q = q.reshape(B, S, HQ, HD).transpose(0, 2, 1, 3)
    k = k.reshape(B, S, HKV, HD).transpose(0, 2, 1, 3)
    v = v.reshape(B, S, HKV, HD).transpose(0, 2, 1, 3)
    k = jnp.repeat(k, N_REP, axis=1)
    v = jnp.repeat(v, N_REP, axis=1)
    s = jnp.einsum('bhqd,bhkd->bhqk', q, k) / math.sqrt(HD)
    s = s + attn_bias4d
    causal = ~jnp.tril(jnp.ones((S, S), bool))
    s = jnp.where(causal[None, None], jnp.finfo(jnp.float32).min, s)
    pw = jax.nn.softmax(s, axis=-1)
    ctx = jnp.einsum('bhqk,bhkd->bhqd', pw, v).transpose(0, 2, 1, 3).reshape(B, S, D)
    x1 = x + ctx @ p['wo'] + p['bo']
    m = ln(x1, p['ln2w'], p['ln2b'])
    g = m @ p['wg']
    g = g * jax.nn.sigmoid(g)
    u = m @ p['wu']
    out = x1 + (g * u) @ p['wd']
    return out, pw


if __name__ == "__main__":
    key = jax.random.PRNGKey(0)
    keys = jax.random.split(key, 12)
    x = jax.random.normal(keys[0], (B, S, D), jnp.float32)

    params = {
        'ln1w': jnp.ones((1, D), jnp.float32),
        'ln1b': jnp.zeros((1, D), jnp.float32),
        'wq':   0.05 * jax.random.normal(keys[1], (D, D), jnp.float32),
        'bq':   0.02 * jax.random.normal(keys[2], (1, D), jnp.float32),
        'wk':   0.05 * jax.random.normal(keys[3], (D, DKV), jnp.float32),
        'bk':   0.02 * jax.random.normal(keys[4], (1, DKV), jnp.float32),
        'wv':   0.05 * jax.random.normal(keys[5], (D, DKV), jnp.float32),
        'bv':   0.02 * jax.random.normal(keys[6], (1, DKV), jnp.float32),
        'wo':   0.05 * jax.random.normal(keys[7], (D, D), jnp.float32),
        'bo':   0.02 * jax.random.normal(keys[8], (1, D), jnp.float32),
        'ln2w': jnp.ones((1, D), jnp.float32),
        'ln2b': jnp.zeros((1, D), jnp.float32),
        'wg':   0.05 * jax.random.normal(keys[9], (D, FF), jnp.float32),
        'wu':   0.05 * jax.random.normal(keys[10], (D, FF), jnp.float32),
        'wd':   0.05 * jax.random.normal(keys[11], (FF, D), jnp.float32),
    }

    # alibi-style attn_bias: PyTorch shape (1, H, 1, S); kernel packing takes (H, S)
    slopes = jnp.array([2.0 ** (-(h + 1)) for h in range(HQ)], jnp.float32)
    rel = -(S - 1 - jnp.arange(S, dtype=jnp.float32))
    attn_bias2d = slopes[:, None] * rel[None, :]            # (HQ, S)

    out, attn_w = transformer_encoder_layer(x, params, attn_bias2d)
    out, attn_w = jax.block_until_ready((out, attn_w))

    ref_out, ref_w = reference(x, params, attn_bias2d[None, :, None, :])
    assert jnp.allclose(out, ref_out, rtol=1e-2, atol=1e-2), "output mismatch"
    assert jnp.allclose(attn_w, ref_w, rtol=1e-2, atol=1e-2), "attn weights mismatch"
    print("KERNEL_OK")
</pallas_src>

<mosaic_0001>
module attributes {stable_mosaic.version = 11 : i64} {
  func.func @encoder_layer_kernel(%arg0: i32, %arg1: memref<2x8x32xf32, #tpu.memory_space<vmem>>, %arg2: memref<4x32xf32, #tpu.memory_space<vmem>>, %arg3: memref<32x96xf32, #tpu.memory_space<vmem>>, %arg4: memref<1x96xf32, #tpu.memory_space<vmem>>, %arg5: memref<32x32xf32, #tpu.memory_space<vmem>>, %arg6: memref<1x32xf32, #tpu.memory_space<vmem>>, %arg7: memref<32x128xf32, #tpu.memory_space<vmem>>, %arg8: memref<64x32xf32, #tpu.memory_space<vmem>>, %arg9: memref<4x8x8xf32, #tpu.memory_space<vmem>>, %arg10: memref<2x8x32xf32, #tpu.memory_space<vmem>>, %arg11: memref<2x4x8x8xf32, #tpu.memory_space<vmem>>, %arg12: memref<2x8x32xf32, #tpu.memory_space<vmem>>) attributes {dimension_semantics = [#tpu.dimension_semantics<arbitrary>], iteration_bounds = array<i64: 1>, scalar_prefetch = 0 : i64, scratch_operands = 1 : i64, tpu.core_type = #tpu.core_type<tc>, window_params = [{pipeline_mode = #tpu.pipeline_mode<synchronous>, transform_indices = @transform_0, window_bounds = array<i64: 2, 8, 32>}, {pipeline_mode = #tpu.pipeline_mode<synchronous>, transform_indices = @transform_1, window_bounds = array<i64: 4, 32>}, {pipeline_mode = #tpu.pipeline_mode<synchronous>, transform_indices = @transform_2, window_bounds = array<i64: 32, 96>}, {pipeline_mode = #tpu.pipeline_mode<synchronous>, transform_indices = @transform_3, window_bounds = array<i64: 1, 96>}, {pipeline_mode = #tpu.pipeline_mode<synchronous>, transform_indices = @transform_4, window_bounds = array<i64: 32, 32>}, {pipeline_mode = #tpu.pipeline_mode<synchronous>, transform_indices = @transform_5, window_bounds = array<i64: 1, 32>}, {pipeline_mode = #tpu.pipeline_mode<synchronous>, transform_indices = @transform_6, window_bounds = array<i64: 32, 128>}, {pipeline_mode = #tpu.pipeline_mode<synchronous>, transform_indices = @transform_7, window_bounds = array<i64: 64, 32>}, {pipeline_mode = #tpu.pipeline_mode<synchronous>, transform_indices = @transform_8, window_bounds = array<i64: 4, 8, 8>}, {pipeline_mode = #tpu.pipeline_mode<synchronous>, transform_indices = @transform_9, window_bounds = array<i64: 2, 8, 32>}, {pipeline_mode = #tpu.pipeline_mode<synchronous>, transform_indices = @transform_10, window_bounds = array<i64: 2, 4, 8, 8>}]} {
    %c0 = arith.constant 0 : index
    %c0_0 = arith.constant 0 : index
    %c0_1 = arith.constant 0 : index
    %0 = vector.load %arg1[%c0, %c0_0, %c0_1] : memref<2x8x32xf32, #tpu.memory_space<vmem>>, vector<2x8x32xf32>
    %1 = vector.shape_cast %0 : vector<2x8x32xf32> to vector<16x32xf32>
    %c0_2 = arith.constant 0 : index
    %c0_3 = arith.constant 0 : index
    %2 = vector.load %arg2[%c0_2, %c0_3] : memref<4x32xf32, #tpu.memory_space<vmem>>, vector<4x32xf32>
    %3 = vector.extract_strided_slice %2 {offsets = [0, 0], sizes = [1, 32], strides = [1, 1]} : vector<4x32xf32> to vector<1x32xf32>
    %4 = vector.extract_strided_slice %2 {offsets = [1, 0], sizes = [1, 32], strides = [1, 1]} : vector<4x32xf32> to vector<1x32xf32>
    %cst = arith.constant dense<0.000000e+00> : vector<16xf32>
    %5 = vector.multi_reduction <add>, %1, %cst [1] : vector<16x32xf32> to vector<16xf32>
    %6 = vector.shape_cast %5 : vector<16xf32> to vector<16x1xf32>
    %cst_4 = arith.constant 3.200000e+01 : f32
    %7 = vector.broadcast %cst_4 : f32 to vector<16x1xf32>
    %8 = arith.divf %6, %7 : vector<16x1xf32>
    %9 = vector.broadcast %8 : vector<16x1xf32> to vector<16x32xf32>
    %10 = arith.subf %1, %9 : vector<16x32xf32>
    %11 = arith.mulf %10, %10 : vector<16x32xf32>
    %cst_5 = arith.constant dense<0.000000e+00> : vector<16xf32>
    %12 = vector.multi_reduction <add>, %11, %cst_5 [1] : vector<16x32xf32> to vector<16xf32>
    %13 = vector.shape_cast %12 : vector<16xf32> to vector<16x1xf32>
    %cst_6 = arith.constant 3.200000e+01 : f32
    %14 = vector.broadcast %cst_6 : f32 to vector<16x1xf32>
    %15 = arith.divf %13, %14 : vector<16x1xf32>
    %16 = vector.broadcast %8 : vector<16x1xf32> to vector<16x32xf32>
    %17 = arith.subf %1, %16 : vector<16x32xf32>
    %cst_7 = arith.constant 9.99999974E-6 : f32
    %18 = vector.broadcast %cst_7 : f32 to vector<16x1xf32>
    %19 = arith.addf %15, %18 : vector<16x1xf32>
    %20 = math.rsqrt %19 : vector<16x1xf32>
    %21 = vector.broadcast %20 : vector<16x1xf32> to vector<16x32xf32>
    %22 = arith.mulf %17, %21 : vector<16x32xf32>
    %23 = vector.broadcast %3 : vector<1x32xf32> to vector<16x32xf32>
    %24 = arith.mulf %22, %23 : vector<16x32xf32>
    %25 = vector.broadcast %4 : vector<1x32xf32> to vector<16x32xf32>
    %26 = arith.addf %24, %25 : vector<16x32xf32>
    %c0_8 = arith.constant 0 : index
    %c0_9 = arith.constant 0 : index
    %27 = vector.load %arg3[%c0_8, %c0_9] : memref<32x96xf32, #tpu.memory_space<vmem>>, vector<32x96xf32>
    %cst_10 = arith.constant dense<0.000000e+00> : vector<16x96xf32>
    %28 = tpu.matmul %26, %27, %cst_10 {dimension_numbers = #tpu.dot_dimension_numbers<[1], [0], [0], [1], [0, 0, 1, 1], [], []>} : vector<16x32xf32>, vector<32x96xf32>, vector<16x96xf32> -> vector<16x96xf32>
    %c0_11 = arith.constant 0 : index
    %c0_12 = arith.constant 0 : index
    %29 = vector.load %arg4[%c0_11, %c0_12] : memref<1x96xf32, #tpu.memory_space<vmem>>, vector<1x96xf32>
    %30 = vector.broadcast %29 : vector<1x96xf32> to vector<16x96xf32>
    %31 = arith.addf %28, %30 : vector<16x96xf32>
    %32 = vector.extract_strided_slice %31 {offsets = [0, 0], sizes = [16, 32], strides = [1, 1]} : vector<16x96xf32> to vector<16x32xf32>
    %33 = vector.shape_cast %32 : vector<16x32xf32> to vector<2x8x32xf32>
    %34 = vector.extract_strided_slice %31 {offsets = [0, 32], sizes = [16, 32], strides = [1, 1]} : vector<16x96xf32> to vector<16x32xf32>
    %35 = vector.shape_cast %34 : vector<16x32xf32> to vector<2x8x32xf32>
    %36 = vector.extract_strided_slice %31 {offsets = [0, 64], sizes = [16, 32], strides = [1, 1]} : vector<16x96xf32> to vector<16x32xf32>
    %37 = vector.shape_cast %36 : vector<16x32xf32> to vector<2x8x32xf32>
    %c0_13 = arith.constant 0 : index
    %c0_14 = arith.constant 0 : index
    %c0_15 = arith.constant 0 : index
    %38 = vector.load %arg9[%c0_13, %c0_14, %c0_15] : memref<4x8x8xf32, #tpu.memory_space<vmem>>, vector<4x8x8xf32>
    %39 = vector.extract_strided_slice %33 {offsets = [0, 0, 0], sizes = [2, 8, 8], strides = [1, 1, 1]} : vector<2x8x32xf32> to vector<2x8x8xf32>
    %40 = vector.extract_strided_slice %35 {offsets = [0, 0, 0], sizes = [2, 8, 8], strides = [1, 1, 1]} : vector<2x8x32xf32> to vector<2x8x8xf32>
    %41 = vector.extract_strided_slice %37 {offsets = [0, 0, 0], sizes = [2, 8, 8], strides = [1, 1, 1]} : vector<2x8x32xf32> to vector<2x8x8xf32>
    "tpu.trace_start"() <{level = 10 : i32, message = "bqd,bkd->bqk"}> : () -> ()
    %cst_16 = arith.constant dense<0.000000e+00> : vector<2x8x8xf32>
    %42 = tpu.matmul %39, %40, %cst_16 {dimension_numbers = #tpu.dot_dimension_numbers<[2], [2], [1], [1], [0, 0, 0, 1, 1, 1], [0], [0]>} : vector<2x8x8xf32>, vector<2x8x8xf32>, vector<2x8x8xf32> -> vector<2x8x8xf32>
    "tpu.trace_stop"() : () -> ()
    %cst_17 = arith.constant 0.353553385 : f32
    %43 = vector.broadcast %cst_17 : f32 to vector<2x8x8xf32>
    %44 = arith.mulf %42, %43 : vector<2x8x8xf32>
    %45 = vector.extract_strided_slice %38 {offsets = [0, 0, 0], sizes = [1, 8, 8], strides = [1, 1, 1]} : vector<4x8x8xf32> to vector<1x8x8xf32>
    %46 = vector.shape_cast %45 : vector<1x8x8xf32> to vector<8x8xf32>
    %47 = vector.shape_cast %46 : vector<8x8xf32> to vector<1x8x8xf32>
    %48 = vector.broadcast %47 : vector<1x8x8xf32> to vector<2x8x8xf32>
    %49 = arith.addf %44, %48 : vector<2x8x8xf32>
    %cst_18 = arith.constant dense<0xFF800000> : vector<2x8xf32>
    %50 = vector.multi_reduction <maximumf>, %49, %cst_18 [2] : vector<2x8x8xf32> to vector<2x8xf32>
    %51 = vector.shape_cast %50 : vector<2x8xf32> to vector<2x8x1xf32>
    %52 = vector.broadcast %51 : vector<2x8x1xf32> to vector<2x8x8xf32>
    %53 = arith.subf %49, %52 : vector<2x8x8xf32>
    %54 = math.exp %53 : vector<2x8x8xf32>
    %cst_19 = arith.constant dense<0.000000e+00> : vector<2x8xf32>
    %55 = vector.multi_reduction <add>, %54, %cst_19 [2] : vector<2x8x8xf32> to vector<2x8xf32>
    %56 = vector.shape_cast %55 : vector<2x8xf32> to vector<2x8x1xf32>
    %57 = tpu.reciprocal %56 {approx = true} : vector<2x8x1xf32> -> vector<2x8x1xf32>
    %58 = vector.broadcast %57 : vector<2x8x1xf32> to vector<2x8x8xf32>
    %59 = arith.mulf %54, %58 : vector<2x8x8xf32>
    "tpu.trace_start"() <{level = 10 : i32, message = "bqk,bkd->bqd"}> : () -> ()
    %cst_20 = arith.constant dense<0.000000e+00> : vector<2x8x8xf32>
    %60 = tpu.matmul %59, %41, %cst_20 {dimension_numbers = #tpu.dot_dimension_numbers<[2], [1], [1], [2], [0, 0, 0, 1, 1, 2], [0], [0]>} : vector<2x8x8xf32>, vector<2x8x8xf32>, vector<2x8x8xf32> -> vector<2x8x8xf32>
    "tpu.trace_stop"() : () -> ()
    %c0_21 = arith.constant 0 : index
    %c0_22 = arith.constant 0 : index
    %c0_23 = arith.constant 0 : index
    %61 = vector.load %arg12[%c0_21, %c0_22, %c0_23] : memref<2x8x32xf32, #tpu.memory_space<vmem>>, vector<2x8x8xf32>
    tpu.vector_store %arg12[%c0_21, %c0_22, %c0_23], %60 {strides = array<i32>} : memref<2x8x32xf32, #tpu.memory_space<vmem>>, vector<2x8x8xf32>,
    %62 = vector.extract_strided_slice %33 {offsets = [0, 0, 8], sizes = [2, 8, 8], strides = [1, 1, 1]} : vector<2x8x32xf32> to vector<2x8x8xf32>
    %63 = vector.extract_strided_slice %35 {offsets = [0, 0, 8], sizes = [2, 8, 8], strides = [1, 1, 1]} : vector<2x8x32xf32> to vector<2x8x8xf32>
    %64 = vector.extract_strided_slice %37 {offsets = [0, 0, 8], sizes = [2, 8, 8], strides = [1, 1, 1]} : vector<2x8x32xf32> to vector<2x8x8xf32>
    "tpu.trace_start"() <{level = 10 : i32, message = "bqd,bkd->bqk"}> : () -> ()
    %cst_24 = arith.constant dense<0.000000e+00> : vector<2x8x8xf32>
    %65 = tpu.matmul %62, %63, %cst_24 {dimension_numbers = #tpu.dot_dimension_numbers<[2], [2], [1], [1], [0, 0, 0, 1, 1, 1], [0], [0]>} : vector<2x8x8xf32>, vector<2x8x8xf32>, vector<2x8x8xf32> -> vector<2x8x8xf32>
    "tpu.trace_stop"() : () -> ()
    %cst_25 = arith.constant 0.353553385 : f32
    %66 = vector.broadcast %cst_25 : f32 to vector<2x8x8xf32>
    %67 = arith.mulf %65, %66 : vector<2x8x8xf32>
    %68 = vector.extract_strided_slice %38 {offsets = [1, 0, 0], sizes = [1, 8, 8], strides = [1, 1, 1]} : vector<4x8x8xf32> to vector<1x8x8xf32>
    %69 = vector.shape_cast %68 : vector<1x8x8xf32> to vector<8x8xf32>
    %70 = vector.shape_cast %69 : vector<8x8xf32> to vector<1x8x8xf32>
    %71 = vector.broadcast %70 : vector<1x8x8xf32> to vector<2x8x8xf32>
    %72 = arith.addf %67, %71 : vector<2x8x8xf32>
    %cst_26 = arith.constant dense<0xFF800000> : vector<2x8xf32>
    %73 = vector.multi_reduction <maximumf>, %72, %cst_26 [2] : vector<2x8x8xf32> to vector<2x8xf32>
    %74 = vector.shape_cast %73 : vector<2x8xf32> to vector<2x8x1xf32>
    %75 = vector.broadcast %74 : vector<2x8x1xf32> to vector<2x8x8xf32>
    %76 = arith.subf %72, %75 : vector<2x8x8xf32>
    %77 = math.exp %76 : vector<2x8x8xf32>
    %cst_27 = arith.constant dense<0.000000e+00> : vector<2x8xf32>
    %78 = vector.multi_reduction <add>, %77, %cst_27 [2] : vector<2x8x8xf32> to vector<2x8xf32>
    %79 = vector.shape_cast %78 : vector<2x8xf32> to vector<2x8x1xf32>
    %80 = tpu.reciprocal %79 {approx = true} : vector<2x8x1xf32> -> vector<2x8x1xf32>
    %81 = vector.broadcast %80 : vector<2x8x1xf32> to vector<2x8x8xf32>
    %82 = arith.mulf %77, %81 : vector<2x8x8xf32>
    "tpu.trace_start"() <{level = 10 : i32, message = "bqk,bkd->bqd"}> : () -> ()
    %cst_28 = arith.constant dense<0.000000e+00> : vector<2x8x8xf32>
    %83 = tpu.matmul %82, %64, %cst_28 {dimension_numbers = #tpu.dot_dimension_numbers<[2], [1], [1], [2], [0, 0, 0, 1, 1, 2], [0], [0]>} : vector<2x8x8xf32>, vector<2x8x8xf32>, vector<2x8x8xf32> -> vector<2x8x8xf32>
    "tpu.trace_stop"() : () -> ()
    %c0_29 = arith.constant 0 : index
    %c0_30 = arith.constant 0 : index
    %c8 = arith.constant 8 : index
    %84 = vector.load %arg12[%c0_29, %c0_30, %c8] : memref<2x8x32xf32, #tpu.memory_space<vmem>>, vector<2x8x8xf32>
    tpu.vector_store %arg12[%c0_29, %c0_30, %c8], %83 {strides = array<i32>} : memref<2x8x32xf32, #tpu.memory_space<vmem>>, vector<2x8x8xf32>,
    %85 = vector.extract_strided_slice %33 {offsets = [0, 0, 16], sizes = [2, 8, 8], strides = [1, 1, 1]} : vector<2x8x32xf32> to vector<2x8x8xf32>
    %86 = vector.extract_strided_slice %35 {offsets = [0, 0, 16], sizes = [2, 8, 8], strides = [1, 1, 1]} : vector<2x8x32xf32> to vector<2x8x8xf32>
    %87 = vector.extract_strided_slice %37 {offsets = [0, 0, 16], sizes = [2, 8, 8], strides = [1, 1, 1]} : vector<2x8x32xf32> to vector<2x8x8xf32>
    "tpu.trace_start"() <{level = 10 : i32, message = "bqd,bkd->bqk"}> : () -> ()
    %cst_31 = arith.constant dense<0.000000e+00> : vector<2x8x8xf32>
    %88 = tpu.matmul %85, %86, %cst_31 {dimension_numbers = #tpu.dot_dimension_numbers<[2], [2], [1], [1], [0, 0, 0, 1, 1, 1], [0], [0]>} : vector<2x8x8xf32>, vector<2x8x8xf32>, vector<2x8x8xf32> -> vector<2x8x8xf32>
    "tpu.trace_stop"() : () -> ()
    %cst_32 = arith.constant 0.353553385 : f32
    %89 = vector.broadcast %cst_32 : f32 to vector<2x8x8xf32>
    %90 = arith.mulf %88, %89 : vector<2x8x8xf32>
    %91 = vector.extract_strided_slice %38 {offsets = [2, 0, 0], sizes = [1, 8, 8], strides = [1, 1, 1]} : vector<4x8x8xf32> to vector<1x8x8xf32>
    %92 = vector.shape_cast %91 : vector<1x8x8xf32> to vector<8x8xf32>
    %93 = vector.shape_cast %92 : vector<8x8xf32> to vector<1x8x8xf32>
    %94 = vector.broadcast %93 : vector<1x8x8xf32> to vector<2x8x8xf32>
    %95 = arith.addf %90, %94 : vector<2x8x8xf32>
    %cst_33 = arith.constant dense<0xFF800000> : vector<2x8xf32>
    %96 = vector.multi_reduction <maximumf>, %95, %cst_33 [2] : vector<2x8x8xf32> to vector<2x8xf32>
    %97 = vector.shape_cast %96 : vector<2x8xf32> to vector<2x8x1xf32>
    %98 = vector.broadcast %97 : vector<2x8x1xf32> to vector<2x8x8xf32>
    %99 = arith.subf %95, %98 : vector<2x8x8xf32>
    %100 = math.exp %99 : vector<2x8x8xf32>
    %cst_34 = arith.constant dense<0.000000e+00> : vector<2x8xf32>
    %101 = vector.multi_reduction <add>, %100, %cst_34 [2] : vector<2x8x8xf32> to vector<2x8xf32>
    %102 = vector.shape_cast %101 : vector<2x8xf32> to vector<2x8x1xf32>
    %103 = tpu.reciprocal %102 {approx = true} : vector<2x8x1xf32> -> vector<2x8x1xf32>
    %104 = vector.broadcast %103 : vector<2x8x1xf32> to vector<2x8x8xf32>
    %105 = arith.mulf %100, %104 : vector<2x8x8xf32>
    "tpu.trace_start"() <{level = 10 : i32, message = "bqk,bkd->bqd"}> : () -> ()
    %cst_35 = arith.constant dense<0.000000e+00> : vector<2x8x8xf32>
    %106 = tpu.matmul %105, %87, %cst_35 {dimension_numbers = #tpu.dot_dimension_numbers<[2], [1], [1], [2], [0, 0, 0, 1, 1, 2], [0], [0]>} : vector<2x8x8xf32>, vector<2x8x8xf32>, vector<2x8x8xf32> -> vector<2x8x8xf32>
    "tpu.trace_stop"() : () -> ()
    %c0_36 = arith.constant 0 : index
    %c0_37 = arith.constant 0 : index
    %c16 = arith.constant 16 : index
    %107 = vector.load %arg12[%c0_36, %c0_37, %c16] : memref<2x8x32xf32, #tpu.memory_space<vmem>>, vector<2x8x8xf32>
    tpu.vector_store %arg12[%c0_36, %c0_37, %c16], %106 {strides = array<i32>} : memref<2x8x32xf32, #tpu.memory_space<vmem>>, vector<2x8x8xf32>,
    %108 = vector.extract_strided_slice %33 {offsets = [0, 0, 24], sizes = [2, 8, 8], strides = [1, 1, 1]} : vector<2x8x32xf32> to vector<2x8x8xf32>
    %109 = vector.extract_strided_slice %35 {offsets = [0, 0, 24], sizes = [2, 8, 8], strides = [1, 1, 1]} : vector<2x8x32xf32> to vector<2x8x8xf32>
    %110 = vector.extract_strided_slice %37 {offsets = [0, 0, 24], sizes = [2, 8, 8], strides = [1, 1, 1]} : vector<2x8x32xf32> to vector<2x8x8xf32>
    "tpu.trace_start"() <{level = 10 : i32, message = "bqd,bkd->bqk"}> : () -> ()
    %cst_38 = arith.constant dense<0.000000e+00> : vector<2x8x8xf32>
    %111 = tpu.matmul %108, %109, %cst_38 {dimension_numbers = #tpu.dot_dimension_numbers<[2], [2], [1], [1], [0, 0, 0, 1, 1, 1], [0], [0]>} : vector<2x8x8xf32>, vector<2x8x8xf32>, vector<2x8x8xf32> -> vector<2x8x8xf32>
    "tpu.trace_stop"() : () -> ()
    %cst_39 = arith.constant 0.353553385 : f32
    %112 = vector.broadcast %cst_39 : f32 to vector<2x8x8xf32>
    %113 = arith.mulf %111, %112 : vector<2x8x8xf32>
    %114 = vector.extract_strided_slice %38 {offsets = [3, 0, 0], sizes = [1, 8, 8], strides = [1, 1, 1]} : vector<4x8x8xf32> to vector<1x8x8xf32>
    %115 = vector.shape_cast %114 : vector<1x8x8xf32> to vector<8x8xf32>
    %116 = vector.shape_cast %115 : vector<8x8xf32> to vector<1x8x8xf32>
    %117 = vector.broadcast %116 : vector<1x8x8xf32> to vector<2x8x8xf32>
    %118 = arith.addf %113, %117 : vector<2x8x8xf32>
    %cst_40 = arith.constant dense<0xFF800000> : vector<2x8xf32>
    %119 = vector.multi_reduction <maximumf>, %118, %cst_40 [2] : vector<2x8x8xf32> to vector<2x8xf32>
    %120 = vector.shape_cast %119 : vector<2x8xf32> to vector<2x8x1xf32>
    %121 = vector.broadcast %120 : vector<2x8x1xf32> to vector<2x8x8xf32>
    %122 = arith.subf %118, %121 : vector<2x8x8xf32>
    %123 = math.exp %122 : vector<2x8x8xf32>
    %cst_41 = arith.constant dense<0.000000e+00> : vector<2x8xf32>
    %124 = vector.multi_reduction <add>, %123, %cst_41 [2] : vector<2x8x8xf32> to vector<2x8xf32>
    %125 = vector.shape_cast %124 : vector<2x8xf32> to vector<2x8x1xf32>
    %126 = tpu.reciprocal %125 {approx = true} : vector<2x8x1xf32> -> vector<2x8x1xf32>
    %127 = vector.broadcast %126 : vector<2x8x1xf32> to vector<2x8x8xf32>
    %128 = arith.mulf %123, %127 : vector<2x8x8xf32>
    "tpu.trace_start"() <{level = 10 : i32, message = "bqk,bkd->bqd"}> : () -> ()
    %cst_42 = arith.constant dense<0.000000e+00> : vector<2x8x8xf32>
    %129 = tpu.matmul %128, %110, %cst_42 {dimension_numbers = #tpu.dot_dimension_numbers<[2], [1], [1], [2], [0, 0, 0, 1, 1, 2], [0], [0]>} : vector<2x8x8xf32>, vector<2x8x8xf32>, vector<2x8x8xf32> -> vector<2x8x8xf32>
    "tpu.trace_stop"() : () -> ()
    %c0_43 = arith.constant 0 : index
    %c0_44 = arith.constant 0 : index
    %c24 = arith.constant 24 : index
    %130 = vector.load %arg12[%c0_43, %c0_44, %c24] : memref<2x8x32xf32, #tpu.memory_space<vmem>>, vector<2x8x8xf32>
    tpu.vector_store %arg12[%c0_43, %c0_44, %c24], %129 {strides = array<i32>} : memref<2x8x32xf32, #tpu.memory_space<vmem>>, vector<2x8x8xf32>,
    %131 = vector.shape_cast %59 : vector<2x8x8xf32> to vector<2x1x8x8xf32>
    %132 = vector.shape_cast %82 : vector<2x8x8xf32> to vector<2x1x8x8xf32>
    %133 = vector.shape_cast %105 : vector<2x8x8xf32> to vector<2x1x8x8xf32>
    %134 = vector.shape_cast %128 : vector<2x8x8xf32> to vector<2x1x8x8xf32>
    %135 = tpu.concatenate %131, %132, %133, %134 in 1 : vector<2x1x8x8xf32>, vector<2x1x8x8xf32>, vector<2x1x8x8xf32>, vector<2x1x8x8xf32> -> vector<2x4x8x8xf32>
    %c0_45 = arith.constant 0 : index
    %c0_46 = arith.constant 0 : index
    %c0_47 = arith.constant 0 : index
    %c0_48 = arith.constant 0 : index
    %136 = vector.load %arg11[%c0_45, %c0_46, %c0_47, %c0_48] : memref<2x4x8x8xf32, #tpu.memory_space<vmem>>, vector<2x4x8x8xf32>
    tpu.vector_store %arg11[%c0_45, %c0_46, %c0_47, %c0_48], %135 {strides = array<i32>} : memref<2x4x8x8xf32, #tpu.memory_space<vmem>>, vector<2x4x8x8xf32>,
    %c0_49 = arith.constant 0 : index
    %c0_50 = arith.constant 0 : index
    %c0_51 = arith.constant 0 : index
    %137 = vector.load %arg12[%c0_49, %c0_50, %c0_51] : memref<2x8x32xf32, #tpu.memory_space<vmem>>, vector<2x8x32xf32>
    %138 = vector.shape_cast %137 : vector<2x8x32xf32> to vector<16x32xf32>
    %c0_52 = arith.constant 0 : index
    %c0_53 = arith.constant 0 : index
    %139 = vector.load %arg5[%c0_52, %c0_53] : memref<32x32xf32, #tpu.memory_space<vmem>>, vector<32x32xf32>
    %cst_54 = arith.constant dense<0.000000e+00> : vector<16x32xf32>
    %140 = tpu.matmul %138, %139, %cst_54 {dimension_numbers = #tpu.dot_dimension_numbers<[1], [0], [0], [1], [0, 0, 1, 1], [], []>} : vector<16x32xf32>, vector<32x32xf32>, vector<16x32xf32> -> vector<16x32xf32>
    %c0_55 = arith.constant 0 : index
    %c0_56 = arith.constant 0 : index
    %141 = vector.load %arg6[%c0_55, %c0_56] : memref<1x32xf32, #tpu.memory_space<vmem>>, vector<1x32xf32>
    %142 = vector.broadcast %141 : vector<1x32xf32> to vector<16x32xf32>
    %143 = arith.addf %140, %142 : vector<16x32xf32>
    %144 = arith.addf %1, %143 : vector<16x32xf32>
    %145 = vector.extract_strided_slice %2 {offsets = [2, 0], sizes = [1, 32], strides = [1, 1]} : vector<4x32xf32> to vector<1x32xf32>
    %146 = vector.extract_strided_slice %2 {offsets = [3, 0], sizes = [1, 32], strides = [1, 1]} : vector<4x32xf32> to vector<1x32xf32>
    %cst_57 = arith.constant dense<0.000000e+00> : vector<16xf32>
    %147 = vector.multi_reduction <add>, %144, %cst_57 [1] : vector<16x32xf32> to vector<16xf32>
    %148 = vector.shape_cast %147 : vector<16xf32> to vector<16x1xf32>
    %cst_58 = arith.constant 3.200000e+01 : f32
    %149 = vector.broadcast %cst_58 : f32 to vector<16x1xf32>
    %150 = arith.divf %148, %149 : vector<16x1xf32>
    %151 = vector.broadcast %150 : vector<16x1xf32> to vector<16x32xf32>
    %152 = arith.subf %144, %151 : vector<16x32xf32>
    %153 = arith.mulf %152, %152 : vector<16x32xf32>
    %cst_59 = arith.constant dense<0.000000e+00> : vector<16xf32>
    %154 = vector.multi_reduction <add>, %153, %cst_59 [1] : vector<16x32xf32> to vector<16xf32>
    %155 = vector.shape_cast %154 : vector<16xf32> to vector<16x1xf32>
    %cst_60 = arith.constant 3.200000e+01 : f32
    %156 = vector.broadcast %cst_60 : f32 to vector<16x1xf32>
    %157 = arith.divf %155, %156 : vector<16x1xf32>
    %158 = vector.broadcast %150 : vector<16x1xf32> to vector<16x32xf32>
    %159 = arith.subf %144, %158 : vector<16x32xf32>
    %cst_61 = arith.constant 9.99999974E-6 : f32
    %160 = vector.broadcast %cst_61 : f32 to vector<16x1xf32>
    %161 = arith.addf %157, %160 : vector<16x1xf32>
    %162 = math.rsqrt %161 : vector<16x1xf32>
    %163 = vector.broadcast %162 : vector<16x1xf32> to vector<16x32xf32>
    %164 = arith.mulf %159, %163 : vector<16x32xf32>
    %165 = vector.broadcast %145 : vector<1x32xf32> to vector<16x32xf32>
    %166 = arith.mulf %164, %165 : vector<16x32xf32>
    %167 = vector.broadcast %146 : vector<1x32xf32> to vector<16x32xf32>
    %168 = arith.addf %166, %167 : vector<16x32xf32>
    %c0_62 = arith.constant 0 : index
    %c0_63 = arith.constant 0 : index
    %169 = vector.load %arg7[%c0_62, %c0_63] : memref<32x128xf32, #tpu.memory_space<vmem>>, vector<32x128xf32>
    %cst_64 = arith.constant dense<0.000000e+00> : vector<16x128xf32>
    %170 = tpu.matmul %168, %169, %cst_64 {dimension_numbers = #tpu.dot_dimension_numbers<[1], [0], [0], [1], [0, 0, 1, 1], [], []>} : vector<16x32xf32>, vector<32x128xf32>, vector<16x128xf32> -> vector<16x128xf32>
    %171 = vector.extract_strided_slice %170 {offsets = [0, 0], sizes = [16, 64], strides = [1, 1]} : vector<16x128xf32> to vector<16x64xf32>
    %172 = vector.extract_strided_slice %170 {offsets = [0, 64], sizes = [16, 64], strides = [1, 1]} : vector<16x128xf32> to vector<16x64xf32>
    %173 = arith.negf %171 : vector<16x64xf32>
    %174 = math.exp %173 : vector<16x64xf32>
    %cst_65 = arith.constant 1.000000e+00 : f32
    %175 = vector.broadcast %cst_65 : f32 to vector<16x64xf32>
    %176 = arith.addf %175, %174 : vector<16x64xf32>
    %177 = arith.divf %175, %176 : vector<16x64xf32>
    %178 = arith.mulf %171, %177 : vector<16x64xf32>
    %179 = arith.mulf %178, %172 : vector<16x64xf32>
    %c0_66 = arith.constant 0 : index
    %c0_67 = arith.constant 0 : index
    %180 = vector.load %arg8[%c0_66, %c0_67] : memref<64x32xf32, #tpu.memory_space<vmem>>, vector<64x32xf32>
    %cst_68 = arith.constant dense<0.000000e+00> : vector<16x32xf32>
    %181 = tpu.matmul %179, %180, %cst_68 {dimension_numbers = #tpu.dot_dimension_numbers<[1], [0], [0], [1], [0, 0, 1, 1], [], []>} : vector<16x64xf32>, vector<64x32xf32>, vector<16x32xf32> -> vector<16x32xf32>
    %182 = arith.addf %144, %181 : vector<16x32xf32>
    %183 = vector.shape_cast %182 : vector<16x32xf32> to vector<2x8x32xf32>
    %c0_69 = arith.constant 0 : index
    %c0_70 = arith.constant 0 : index
    %c0_71 = arith.constant 0 : index
    %184 = vector.load %arg10[%c0_69, %c0_70, %c0_71] : memref<2x8x32xf32, #tpu.memory_space<vmem>>, vector<2x8x32xf32>
    tpu.vector_store %arg10[%c0_69, %c0_70, %c0_71], %183 {strides = array<i32>} : memref<2x8x32xf32, #tpu.memory_space<vmem>>, vector<2x8x32xf32>,
    return
  }
  func.func @transform_0(%arg0: i32) -> (i32, i32, i32) {
    %c0_i32 = arith.constant 0 : i32
    %c0_i32_0 = arith.constant 0 : i32
    %c0_i32_1 = arith.constant 0 : i32
    %c0_i32_2 = arith.constant 0 : i32
    return %c0_i32, %c0_i32_0, %c0_i32_1 : i32, i32, i32
  }
  func.func @transform_1(%arg0: i32) -> (i32, i32) {
    %c0_i32 = arith.constant 0 : i32
    %c0_i32_0 = arith.constant 0 : i32
    %c0_i32_1 = arith.constant 0 : i32
    return %c0_i32, %c0_i32_0 : i32, i32
  }
  func.func @transform_2(%arg0: i32) -> (i32, i32) {
    %c0_i32 = arith.constant 0 : i32
    %c0_i32_0 = arith.constant 0 : i32
    %c0_i32_1 = arith.constant 0 : i32
    return %c0_i32, %c0_i32_0 : i32, i32
  }
  func.func @transform_3(%arg0: i32) -> (i32, i32) {
    %c0_i32 = arith.constant 0 : i32
    %c0_i32_0 = arith.constant 0 : i32
    %c0_i32_1 = arith.constant 0 : i32
    return %c0_i32, %c0_i32_0 : i32, i32
  }
  func.func @transform_4(%arg0: i32) -> (i32, i32) {
    %c0_i32 = arith.constant 0 : i32
    %c0_i32_0 = arith.constant 0 : i32
    %c0_i32_1 = arith.constant 0 : i32
    return %c0_i32, %c0_i32_0 : i32, i32
  }
  func.func @transform_5(%arg0: i32) -> (i32, i32) {
    %c0_i32 = arith.constant 0 : i32
    %c0_i32_0 = arith.constant 0 : i32
    %c0_i32_1 = arith.constant 0 : i32
    return %c0_i32, %c0_i32_0 : i32, i32
  }
  func.func @transform_6(%arg0: i32) -> (i32, i32) {
    %c0_i32 = arith.constant 0 : i32
    %c0_i32_0 = arith.constant 0 : i32
    %c0_i32_1 = arith.constant 0 : i32
    return %c0_i32, %c0_i32_0 : i32, i32
  }
  func.func @transform_7(%arg0: i32) -> (i32, i32) {
    %c0_i32 = arith.constant 0 : i32
    %c0_i32_0 = arith.constant 0 : i32
    %c0_i32_1 = arith.constant 0 : i32
    return %c0_i32, %c0_i32_0 : i32, i32
  }
  func.func @transform_8(%arg0: i32) -> (i32, i32, i32) {
    %c0_i32 = arith.constant 0 : i32
    %c0_i32_0 = arith.constant 0 : i32
    %c0_i32_1 = arith.constant 0 : i32
    %c0_i32_2 = arith.constant 0 : i32
    return %c0_i32, %c0_i32_0, %c0_i32_1 : i32, i32, i32
  }
  func.func @transform_9(%arg0: i32) -> (i32, i32, i32) {
    %c0_i32 = arith.constant 0 : i32
    %c0_i32_0 = arith.constant 0 : i32
    %c0_i32_1 = arith.constant 0 : i32
    %c0_i32_2 = arith.constant 0 : i32
    return %c0_i32, %c0_i32_0, %c0_i32_1 : i32, i32, i32
  }
  func.func @transform_10(%arg0: i32) -> (i32, i32, i32, i32) {
    %c0_i32 = arith.constant 0 : i32
    %c0_i32_0 = arith.constant 0 : i32
    %c0_i32_1 = arith.constant 0 : i32
    %c0_i32_2 = arith.constant 0 : i32
    %c0_i32_3 = arith.constant 0 : i32
    return %c0_i32, %c0_i32_0, %c0_i32_1, %c0_i32_2 : i32, i32, i32, i32
  }
}

</mosaic_0001>

<llo_original>
// kernel: tpu_custom_call.1
$region0: #{tpu_custom_call.1}
  #allocation0 [shape = 'u32[]', space=smem, size = 0x4, offset = 0x4, fixed_abs, tag = 'smem constant byte address 0x4 - core index']
  #allocation1 [shape = 'u32[144,128]{1,0:T(1,128)}', space=vmem, size = 0x12000, scoped, tag = 'internal scratch']
  #allocation2 [shape = 'f32[2,8,32]{2,1,0:T(8,128)}', space=vmem, size = 0x2000, scoped, tag = 'scratch operand']
  %s0 = inlined_call_operand.hbm [shape: f32[2,8,32], index: 0, kind: input, shape index: {}]
  %s1 = inlined_call_operand.hbm [shape: f32[4,32], index: 1, kind: input, shape index: {}]
  %s2 = inlined_call_operand.vmem [shape: f32[32,96], index: 2, kind: input, shape index: {}]
  %s3 = inlined_call_operand.vmem [shape: f32[1,96], index: 3, kind: input, shape index: {}]
  %s4 = inlined_call_operand.vmem [shape: f32[32,32], index: 4, kind: input, shape index: {}]
  %s5 = inlined_call_operand.vmem [shape: f32[1,32], index: 5, kind: input, shape index: {}]
  %s6 = inlined_call_operand.vmem [shape: f32[32,128], index: 6, kind: input, shape index: {}]
  %s7 = inlined_call_operand.vmem [shape: f32[64,32], index: 7, kind: input, shape index: {}]
  %s8 = inlined_call_operand.hbm [shape: f32[4,8,8], index: 8, kind: input, shape index: {}]
  %s9 = inlined_call_operand.hbm [shape: f32[2,8,32], index: 9, kind: output, shape index: {0}]
  %s10 = inlined_call_operand.hbm [shape: f32[2,4,8,8], index: 10, kind: output, shape index: {1}]
  %11 = xla_tuple %s9, %s10
  %s12 = sld [smem:[#allocation0]]
  $region66: #{tpu_custom_call.1} parent=0
    _
  %s14 = ssub.s32 1, %s12
  %s15 = scalar_select 0, %s14, %s12
  $region1: #{tpu_custom_call.1} parent=0
    #allocation3 [shape = 'u8[8192]{0}', space=vmem, size = 0x2000, scoped, tag = 'input window, operand 0, single buffered']
    #allocation4 [shape = 's32[1]{0}', space=sflag, size = 0x4, scoped, tag = 'scoped memory for tpu_custom_call.1']
    #allocation5 [shape = 's32[1]{0}', space=sflag, size = 0x4, scoped, tag = 'scoped memory for tpu_custom_call.1']
    #allocation6 [shape = 'u8[2048]{0}', space=vmem, size = 0x800, scoped, tag = 'input window, operand 1, single buffered']
    #allocation7 [shape = 's32[1]{0}', space=sflag, size = 0x4, scoped, tag = 'scoped memory for tpu_custom_call.1']
    #allocation8 [shape = 'u8[16384]{0}', space=vmem, size = 0x4000, scoped, tag = 'input window, operand 8, single buffered']
    #allocation9 [shape = 'u8[8192]{0}', space=vmem, size = 0x2000, scoped, tag = 'output window, operand 0, single buffered']
    #allocation10 [shape = 'u8[32768]{0}', space=vmem, size = 0x8000, scoped, tag = 'output window, operand 1, single buffered']
    #allocation11 [shape = 's32[1]{0}', space=sflag, size = 0x4, scoped, tag = 'scoped memory for tpu_custom_call.1']
    %16 = vsyncpa [#allocation4], 0
    %17 = vsyncpa [#allocation7], 0
    %18 = vsyncpa [#allocation5], 0
    %19 = vsyncpa [#allocation11], 0
    // Predicated region
    $region2: #{tpu_custom_call.1} parent=1 // pred_check
      _
    $region3: #{tpu_custom_call.1} parent=1 // pred_check_branch
      %21 = sbr.rel (0) target = $region5
    $region4: #{tpu_custom_call.1} parent=1 // pred_region
      %s23 = ssub.s32 256, 256
      %24 = vsyncadd [#allocation4], %s23
      %s25 = sshll.u32 [#allocation3], 4
      %s26 = int_to_ptr.vmem [resolvable:$true] %s25
      %31 = dma.hbm_to_vmem [thread:$0]  %s0, 256, %s26, [#allocation4], 128, 128, 8
    $region5: #{tpu_custom_call.1} parent=1 // pred_fallthru
      _
    // Predicated region
    $region6: #{tpu_custom_call.1} parent=1 // pred_check
      _
    $region7: #{tpu_custom_call.1} parent=1 // pred_check_branch
      %33 = sbr.rel (0) target = $region9
    $region8: #{tpu_custom_call.1} parent=1 // pred_region
      %s35 = ssub.s32 64, 64
      %36 = vsyncadd [#allocation7], %s35
      %s38 = sshll.u32 [#allocation6], 4
      %s39 = int_to_ptr.vmem [resolvable:$true] %s38
      %41 = dma.hbm_to_vmem [thread:$0]  %s1, 64, %s39, [#allocation7]
    $region9: #{tpu_custom_call.1} parent=1 // pred_fallthru
      _
    // Predicated region
    $region10: #{tpu_custom_call.1} parent=1 // pred_check
      _
    $region11: #{tpu_custom_call.1} parent=1 // pred_check_branch
      %43 = sbr.rel (0) target = $region13
    $region12: #{tpu_custom_call.1} parent=1 // pred_region
      _
    $region13: #{tpu_custom_call.1} parent=1 // pred_fallthru
      _
    // Predicated region
    $region14: #{tpu_custom_call.1} parent=1 // pred_check
      _
    $region15: #{tpu_custom_call.1} parent=1 // pred_check_branch
      %45 = sbr.rel (0) target = $region17
    $region16: #{tpu_custom_call.1} parent=1 // pred_region
      _
    $region17: #{tpu_custom_call.1} parent=1 // pred_fallthru
      _
    // Predicated region
    $region18: #{tpu_custom_call.1} parent=1 // pred_check
      _
    $region19: #{tpu_custom_call.1} parent=1 // pred_check_branch
      %47 = sbr.rel (0) target = $region21
    $region20: #{tpu_custom_call.1} parent=1 // pred_region
      _
    $region21: #{tpu_custom_call.1} parent=1 // pred_fallthru
      _
    // Predicated region
    $region22: #{tpu_custom_call.1} parent=1 // pred_check
      _
    $region23: #{tpu_custom_call.1} parent=1 // pred_check_branch
      %49 = sbr.rel (0) target = $region25
    $region24: #{tpu_custom_call.1} parent=1 // pred_region
      _
    $region25: #{tpu_custom_call.1} parent=1 // pred_fallthru
      _
    // Predicated region
    $region26: #{tpu_custom_call.1} parent=1 // pred_check
      _
    $region27: #{tpu_custom_call.1} parent=1 // pred_check_branch
      %51 = sbr.rel (0) target = $region29
    $region28: #{tpu_custom_call.1} parent=1 // pred_region
      _
    $region29: #{tpu_custom_call.1} parent=1 // pred_fallthru
      _
    // Predicated region
    $region30: #{tpu_custom_call.1} parent=1 // pred_check
      _
    $region31: #{tpu_custom_call.1} parent=1 // pred_check_branch
      %53 = sbr.rel (0) target = $region33
    $region32: #{tpu_custom_call.1} parent=1 // pred_region
      _
    $region33: #{tpu_custom_call.1} parent=1 // pred_fallthru
      _
    // Predicated region
    $region34: #{tpu_custom_call.1} parent=1 // pred_check
      _
    $region35: #{tpu_custom_call.1} parent=1 // pred_check_branch
      %55 = sbr.rel (0) target = $region37
    $region36: #{tpu_custom_call.1} parent=1 // pred_region
      %s57 = ssub.s32 512, 512
      %58 = vsyncadd [#allocation7], %s57
      %s59 = sshll.u32 [#allocation8], 4
      %s60 = int_to_ptr.vmem [resolvable:$true] %s59
      %65 = dma.hbm_to_vmem [thread:$0]  %s8, 512, %s60, [#allocation7], 128, 128, 8
    $region37: #{tpu_custom_call.1} parent=1 // pred_fallthru
      _
    // Predicated region
    $region38: #{tpu_custom_call.1} parent=1 // pred_check
      _
    $region39: #{tpu_custom_call.1} parent=1 // pred_check_branch
      %67 = sbr.rel (0) target = $region41
    $region40: #{tpu_custom_call.1} parent=1 // pred_region
      %68 = dma.done [#allocation4], 256
    $region41: #{tpu_custom_call.1} parent=1 // pred_fallthru
      _
    // Predicated region
    $region42: #{tpu_custom_call.1} parent=1 // pred_check
      _
    $region43: #{tpu_custom_call.1} parent=1 // pred_check_branch
      %70 = sbr.rel (0) target = $region45
    $region44: #{tpu_custom_call.1} parent=1 // pred_region
      %71 = dma.done [#allocation7], 64
    $region45: #{tpu_custom_call.1} parent=1 // pred_fallthru
      _
    // Predicated region
    $region46: #{tpu_custom_call.1} parent=1 // pred_check
      _
    $region47: #{tpu_custom_call.1} parent=1 // pred_check_branch
      %73 = sbr.rel (0) target = $region49
    $region48: #{tpu_custom_call.1} parent=1 // pred_region
      %74 = dma.done [#allocation7], 512
    $region49: #{tpu_custom_call.1} parent=1 // pred_fallthru
      _
    %v75 = vld [vmem:[#allocation3] sm:$0xff]
    %v76 = vld [vmem:[#allocation3 + $0x8] sm:$0xff]
    %v77 = vld [vmem:[#allocation6] sm:$0xf]
    %vm78 = vcmask 261120
    %v79 = vsel %vm78, %v75, 0.0
    %80 = vadd.xlane.f32.xlu0 %v79
    %v81 = vpop.xlane.xlu0 %80
    %v82 = vsel %vm78, %v76, 0.0
    %83 = vadd.xlane.f32.xlu0 %v82
    %v84 = vpop.xlane.xlu0 %83
    %v85 = vrcp.pop 32.0
    %v86 = vmul.f32 %v81, %v85
    %v87 = vmul.f32 %v84, %v85
    %v88 = vsub.f32 %v75, %v86
    %v89 = vsub.f32 %v76, %v87
    %v90 = vmul.f32 %v88, %v88
    %v91 = vmul.f32 %v89, %v89
    %v92 = vsel %vm78, %v90, 0.0
    %93 = vadd.xlane.f32.xlu0 %v92
    %v94 = vpop.xlane.xlu0 %93
    %v95 = vsel %vm78, %v91, 0.0
    %96 = vadd.xlane.f32.xlu0 %v95
    %v97 = vpop.xlane.xlu0 %96
    %v98 = vmul.f32 %v94, %v85
    %v99 = vmul.f32 %v97, %v85
    %v100 = vadd.f32 %v98, 1e-05
    %v101 = vadd.f32 %v99, 1e-05
    %v102 = vrsqrt.pop %v100
    %v103 = vrsqrt.pop %v101
    %v104 = vmul.f32 %v88, %v102
    %v105 = vmul.f32 %v89, %v103
    %v106 = vlaneseq
    %v107 = vshrl.u32 %v106, 7
    %v108 = vsub.s32 0, %v107
    %v109 = vrot.slane %v77, %v108
    %v110 = vmul.f32 %v104, %v109
    %v111 = vmul.f32 %v105, %v109
    %v112 = vlaneseq
    %v113 = vshrl.u32 %v112, 7
    %v114 = vsub.s32 1, %v113
    %v115 = vrot.slane %v77, %v114
    %v116 = vadd.f32 %v110, %v115
    %v117 = vadd.f32 %v111, %v115
    %v118 = vld [vmem:[%s2] sm:$0xff]
    %v119 = vld [vmem:[%s2 + $0x8] sm:$0xff]
    %v120 = vld [vmem:[%s2 + $0x10] sm:$0xff]
    %v121 = vld [vmem:[%s2 + $0x18] sm:$0xff]
    %v122 = vld [vmem:[%s3] sm:$0x1]
    %v124 = vlaneseq
    %v125 = vshrl.u32 %v124, 7
    %v126 = vsub.s32 0, %v125
    %v127 = vrot.slane %v122, %v126
    %v130 = vsel %vm78, %v116, 0
    %v133 = vsel %vm78, %v117, 0
    %135 = vmatprep.subr.mxu0 0.0
    %136 = vmatpush1.msra.mxu0 %v118
    %137 = vmatprep.subr.mxu0 0.0
    %138 = vmatpush1.msra.mxu0 %v119
    %139 = vmatprep.subr.mxu0 0.0
    %140 = vmatpush1.msra.mxu0 %v120
    %141 = vmatprep.subr.mxu0 0.0
    %142 = vmatpush1.msra.mxu0 %v121
    %143 = vmatprep.subr.mxu0 0.0
    %144 = vmatpush1.msra.mxu0 0.0
    %145 = vmatprep.subr.mxu0 0.0
    %146 = vmatpush1.msra.mxu0 0.0
    %147 = vmatprep.subr.mxu0 0.0
    %148 = vmatpush1.msra.mxu0 0.0
    %149 = vmatprep.subr.mxu0 0.0
    %150 = vmatpush1.msra.mxu0 0.0
    %151 = vmatprep.subr.mxu0 0.0
    %152 = vmatpush1.msra.mxu0 0.0
    %153 = vmatprep.subr.mxu0 0.0
    %154 = vmatpush1.msra.mxu0 0.0
    %155 = vmatprep.subr.mxu0 0.0
    %156 = vmatpush1.msra.mxu0 0.0
    %157 = vmatprep.subr.mxu0 0.0
    %158 = vmatpush1.msra.mxu0 0.0
    %159 = vmatprep.subr.mxu0 0.0
    %160 = vmatpush1.msra.mxu0 0.0
    %161 = vmatprep.subr.mxu0 0.0
    %162 = vmatpush1.msra.mxu0 0.0
    %163 = vmatprep.subr.mxu0 0.0
    %164 = vmatpush1.msra.mxu0 0.0
    %165 = vmatprep.subr.mxu0 0.0
    %166 = vmatpush1.msra.mxu0 0.0
    %167 = vmatprep.subr.mxu0 0.0
    %168 = vmatpush1.msra.mxu0 0.0
    %169 = vmatprep.subr.mxu0 0.0
    %170 = vmatpush1.msra.mxu0 0.0
    %171 = vmatprep.subr.mxu0 0.0
    %172 = vmatpush1.msra.mxu0 0.0
    %173 = vmatprep.subr.mxu0 0.0
    %174 = vmatpush1.msra.mxu0 0.0
    %175 = vmatprep.subr.mxu0 0.0
    %176 = vmatpush1.msra.mxu0 0.0
    %177 = vmatprep.subr.mxu0 0.0
    %178 = vmatpush1.msra.mxu0 0.0
    %179 = vmatprep.subr.mxu0 0.0
    %180 = vmatpush1.msra.mxu0 0.0
    %181 = vmatprep.subr.mxu0 0.0
    %182 = vmatpush1.msra.mxu0 0.0
    %183 = vmatprep.subr.mxu0 0.0
    %184 = vmatpush1.msra.mxu0 0.0
    %185 = vmatprep.subr.mxu0 0.0
    %186 = vmatpush1.msra.mxu0 0.0
    %187 = vmatprep.subr.mxu0 0.0
    %188 = vmatpush1.msra.mxu0 0.0
    %189 = vmatprep.subr.mxu0 0.0
    %190 = vmatpush1.msra.mxu0 0.0
    %191 = vmatprep.subr.mxu0 0.0
    %192 = vmatpush1.msra.mxu0 0.0
    %193 = vmatprep.subr.mxu0 0.0
    %194 = vmatpush1.msra.mxu0 0.0
    %195 = vmatprep.subr.mxu0 0.0
    %196 = vmatpush1.msra.mxu0 0.0
    %197 = vmatprep.subr.mxu0 0.0
    %198 = vmatpush1.msra.mxu0 0.0
    %199 = vmatprep.mubr.f32.mxu0 0.0
    %200 = vmatmul.mubr.f32.gmra.mrb[0].mxu0 %v130
    %v201 = vpop.f32.mrb[0].mxu0
    %v202 = vadd.f32 %v127, %v201
    %v203 = vpop.f32.mrb[0].mxu0
    %204 = vmatprep.mubr.f32.mxu0 0.0
    %205 = vmatmul.mubr.f32.gmra.mrb[0].mxu0 %v133
    %v206 = vpop.f32.mrb[0].mxu0
    %v207 = vadd.f32 %v127, %v206
    %v208 = vpop.f32.mrb[0].mxu0
    %209 = vdwg.mxu0
    %v210 = vld [vmem:[#allocation8] sm:$0xff]
    %v211 = vld [vmem:[#allocation8 + $0x8] sm:$0xff]
    %v212 = vld [vmem:[#allocation8 + $0x10] sm:$0xff]
    %v213 = vld [vmem:[#allocation8 + $0x18] sm:$0xff]
    %215 = vrot.lane.b32.xlu0 %v202, 96
    %v216 = vpop.permute.xlu0 %215
    %vm217 = vcmask 64512
    %v218 = vsel %vm217, %v202, 0
    %v220 = vsel %vm217, %v216, 0
    %222 = vmatprep.subr.mxu0 0.0
    %223 = vmatpush1.xpose.msra.mxu0 %v220
    %224 = vmatprep.subr.mxu0 0.0
    %225 = vmatpush1.xpose.msra.mxu0 0.0
    %226 = vmatprep.subr.mxu0 0.0
    %227 = vmatpush1.xpose.msra.mxu0 0.0
    %228 = vmatprep.subr.mxu0 0.0
    %229 = vmatpush1.xpose.msra.mxu0 0.0
    %230 = vmatprep.subr.mxu0 0.0
    %231 = vmatpush1.xpose.msra.mxu0 0.0
    %232 = vmatprep.subr.mxu0 0.0
    %233 = vmatpush1.xpose.msra.mxu0 0.0
    %234 = vmatprep.subr.mxu0 0.0
    %235 = vmatpush1.xpose.msra.mxu0 0.0
    %236 = vmatprep.subr.mxu0 0.0
    %237 = vmatpush1.xpose.msra.mxu0 0.0
    %238 = vmatprep.subr.mxu0 0.0
    %239 = vmatpush1.xpose.msra.mxu0 0.0
    %240 = vmatprep.subr.mxu0 0.0
    %241 = vmatpush1.xpose.msra.mxu0 0.0
    %242 = vmatprep.subr.mxu0 0.0
    %243 = vmatpush1.xpose.msra.mxu0 0.0
    %244 = vmatprep.subr.mxu0 0.0
    %245 = vmatpush1.xpose.msra.mxu0 0.0
    %246 = vmatprep.subr.mxu0 0.0
    %247 = vmatpush1.xpose.msra.mxu0 0.0
    %248 = vmatprep.subr.mxu0 0.0
    %249 = vmatpush1.xpose.msra.mxu0 0.0
    %250 = vmatprep.subr.mxu0 0.0
    %251 = vmatpush1.xpose.msra.mxu0 0.0
    %252 = vmatprep.subr.mxu0 0.0
    %253 = vmatpush1.xpose.msra.mxu0 0.0
    %254 = vmatprep.subr.mxu0 0.0
    %255 = vmatpush1.xpose.msra.mxu0 0.0
    %256 = vmatprep.subr.mxu0 0.0
    %257 = vmatpush1.xpose.msra.mxu0 0.0
    %258 = vmatprep.subr.mxu0 0.0
    %259 = vmatpush1.xpose.msra.mxu0 0.0
    %260 = vmatprep.subr.mxu0 0.0
    %261 = vmatpush1.xpose.msra.mxu0 0.0
    %262 = vmatprep.subr.mxu0 0.0
    %263 = vmatpush1.xpose.msra.mxu0 0.0
    %264 = vmatprep.subr.mxu0 0.0
    %265 = vmatpush1.xpose.msra.mxu0 0.0
    %266 = vmatprep.subr.mxu0 0.0
    %267 = vmatpush1.xpose.msra.mxu0 0.0
    %268 = vmatprep.subr.mxu0 0.0
    %269 = vmatpush1.xpose.msra.mxu0 0.0
    %270 = vmatprep.subr.mxu0 0.0
    %271 = vmatpush1.xpose.msra.mxu0 0.0
    %272 = vmatprep.subr.mxu0 0.0
    %273 = vmatpush1.xpose.msra.mxu0 0.0
    %274 = vmatprep.subr.mxu0 0.0
    %275 = vmatpush1.xpose.msra.mxu0 0.0
    %276 = vmatprep.subr.mxu0 0.0
    %277 = vmatpush1.xpose.msra.mxu0 0.0
    %278 = vmatprep.subr.mxu0 0.0
    %279 = vmatpush1.xpose.msra.mxu0 0.0
    %280 = vmatprep.subr.mxu0 0.0
    %281 = vmatpush1.xpose.msra.mxu0 0.0
    %282 = vmatprep.subr.mxu0 0.0
    %283 = vmatpush1.xpose.msra.mxu0 0.0
    %284 = vmatprep.subr.mxu0 0.0
    %285 = vmatpush1.xpose.msra.mxu0 0.0
    %286 = vmatprep.mubr.f32.mxu0 0.0
    %287 = vmatmul.mubr.f32.gmra.mrb[0].mxu0 %v218
    %v288 = vpop.f32.mrb[0].mxu0
    %v289 = vadd.f32 0.0, %v288
    %v290 = vpop.f32.mrb[0].mxu0
    %291 = vdwg.mxu0
    %293 = vrot.lane.b32.xlu0 %v207, 96
    %v294 = vpop.permute.xlu0 %293
    %v295 = vsel %vm217, %v207, 0
    %v297 = vsel %vm217, %v294, 0
    %299 = vmatprep.subr.mxu0 0.0
    %300 = vmatpush1.xpose.msra.mxu0 %v297
    %301 = vmatprep.subr.mxu0 0.0
    %302 = vmatpush1.xpose.msra.mxu0 0.0
    %303 = vmatprep.subr.mxu0 0.0
    %304 = vmatpush1.xpose.msra.mxu0 0.0
    %305 = vmatprep.subr.mxu0 0.0
    %306 = vmatpush1.xpose.msra.mxu0 0.0
    %307 = vmatprep.subr.mxu0 0.0
    %308 = vmatpush1.xpose.msra.mxu0 0.0
    %309 = vmatprep.subr.mxu0 0.0
    %310 = vmatpush1.xpose.msra.mxu0 0.0
    %311 = vmatprep.subr.mxu0 0.0
    %312 = vmatpush1.xpose.msra.mxu0 0.0
    %313 = vmatprep.subr.mxu0 0.0
    %314 = vmatpush1.xpose.msra.mxu0 0.0
    %315 = vmatprep.subr.mxu0 0.0
    %316 = vmatpush1.xpose.msra.mxu0 0.0
    %317 = vmatprep.subr.mxu0 0.0
    %318 = vmatpush1.xpose.msra.mxu0 0.0
    %319 = vmatprep.subr.mxu0 0.0
    %320 = vmatpush1.xpose.msra.mxu0 0.0
    %321 = vmatprep.subr.mxu0 0.0
    %322 = vmatpush1.xpose.msra.mxu0 0.0
    %323 = vmatprep.subr.mxu0 0.0
    %324 = vmatpush1.xpose.msra.mxu0 0.0
    %325 = vmatprep.subr.mxu0 0.0
    %326 = vmatpush1.xpose.msra.mxu0 0.0
    %327 = vmatprep.subr.mxu0 0.0
    %328 = vmatpush1.xpose.msra.mxu0 0.0
    %329 = vmatprep.subr.mxu0 0.0
    %330 = vmatpush1.xpose.msra.mxu0 0.0
    %331 = vmatprep.subr.mxu0 0.0
    %332 = vmatpush1.xpose.msra.mxu0 0.0
    %333 = vmatprep.subr.mxu0 0.0
    %334 = vmatpush1.xpose.msra.mxu0 0.0
    %335 = vmatprep.subr.mxu0 0.0
    %336 = vmatpush1.xpose.msra.mxu0 0.0
    %337 = vmatprep.subr.mxu0 0.0
    %338 = vmatpush1.xpose.msra.mxu0 0.0
    %339 = vmatprep.subr.mxu0 0.0
    %340 = vmatpush1.xpose.msra.mxu0 0.0
    %341 = vmatprep.subr.mxu0 0.0
    %342 = vmatpush1.xpose.msra.mxu0 0.0
    %343 = vmatprep.subr.mxu0 0.0
    %344 = vmatpush1.xpose.msra.mxu0 0.0
    %345 = vmatprep.subr.mxu0 0.0
    %346 = vmatpush1.xpose.msra.mxu0 0.0
    %347 = vmatprep.subr.mxu0 0.0
    %348 = vmatpush1.xpose.msra.mxu0 0.0
    %349 = vmatprep.subr.mxu0 0.0
    %350 = vmatpush1.xpose.msra.mxu0 0.0
    %351 = vmatprep.subr.mxu0 0.0
    %352 = vmatpush1.xpose.msra.mxu0 0.0
    %353 = vmatprep.subr.mxu0 0.0
    %354 = vmatpush1.xpose.msra.mxu0 0.0
    %355 = vmatprep.subr.mxu0 0.0
    %356 = vmatpush1.xpose.msra.mxu0 0.0
    %357 = vmatprep.subr.mxu0 0.0
    %358 = vmatpush1.xpose.msra.mxu0 0.0
    %359 = vmatprep.subr.mxu0 0.0
    %360 = vmatpush1.xpose.msra.mxu0 0.0
    %361 = vmatprep.subr.mxu0 0.0
    %362 = vmatpush1.xpose.msra.mxu0 0.0
    %363 = vmatprep.mubr.f32.mxu0 0.0
    %364 = vmatmul.mubr.f32.gmra.mrb[0].mxu0 %v295
    %v365 = vpop.f32.mrb[0].mxu0
    %v366 = vadd.f32 0.0, %v365
    %v367 = vpop.f32.mrb[0].mxu0
    %368 = vdwg.mxu0
    %v369 = vmul.f32 %v289, 0.35355338
    %v370 = vmul.f32 %v366, 0.35355338
    %v371 = vadd.f32 %v369, %v210
    %v372 = vadd.f32 %v370, %v210
    %v373 = vsel %vm217, %v371, -inf
    %374 = vmax.xlane.f32.xlu0 %v373
    %v375 = vpop.xlane.xlu0 %374
    %v376 = vsel %vm217, %v372, -inf
    %377 = vmax.xlane.f32.xlu0 %v376
    %v378 = vpop.xlane.xlu0 %377
    %v379 = vsub.f32 %v371, %v375
    %v380 = vsub.f32 %v372, %v378
    %v381 = vmul.f32 %v379, 1.442695
    %v382 = vpow.pop %v381
    %v383 = vmul.f32 %v380, 1.442695
    %v384 = vpow.pop %v383
    %v385 = vsel %vm217, %v382, 0.0
    %386 = vadd.xlane.f32.xlu0 %v385
    %v387 = vpop.xlane.xlu0 %386
    %v388 = vsel %vm217, %v384, 0.0
    %389 = vadd.xlane.f32.xlu0 %v388
    %v390 = vpop.xlane.xlu0 %389
    %v391 = vrcp.pop %v387
    %v392 = vrcp.pop %v390
    %v393 = vmul.f32 %v382, %v391
    %v394 = vmul.f32 %v384, %v392
    %395 = vrot.lane.b32.xlu0 %v202, 64
    %v396 = vpop.permute.xlu0 %395
    %v399 = vsel %vm217, %v393, 0
    %401 = vmatprep.subr.mxu0 0.0
    %402 = vmatpush1.msra.mxu0 %v396
    %403 = vmatprep.subr.mxu0 0.0
    %404 = vmatpush1.msra.mxu0 0.0
    %405 = vmatprep.subr.mxu0 0.0
    %406 = vmatpush1.msra.mxu0 0.0
    %407 = vmatprep.subr.mxu0 0.0
    %408 = vmatpush1.msra.mxu0 0.0
    %409 = vmatprep.subr.mxu0 0.0
    %410 = vmatpush1.msra.mxu0 0.0
    %411 = vmatprep.subr.mxu0 0.0
    %412 = vmatpush1.msra.mxu0 0.0
    %413 = vmatprep.subr.mxu0 0.0
    %414 = vmatpush1.msra.mxu0 0.0
    %415 = vmatprep.subr.mxu0 0.0
    %416 = vmatpush1.msra.mxu0 0.0
    %417 = vmatprep.subr.mxu0 0.0
    %418 = vmatpush1.msra.mxu0 0.0
    %419 = vmatprep.subr.mxu0 0.0
    %420 = vmatpush1.msra.mxu0 0.0
    %421 = vmatprep.subr.mxu0 0.0
    %422 = vmatpush1.msra.mxu0 0.0
    %423 = vmatprep.subr.mxu0 0.0
    %424 = vmatpush1.msra.mxu0 0.0
    %425 = vmatprep.subr.mxu0 0.0
    %426 = vmatpush1.msra.mxu0 0.0
    %427 = vmatprep.subr.mxu0 0.0
    %428 = vmatpush1.msra.mxu0 0.0
    %429 = vmatprep.subr.mxu0 0.0
    %430 = vmatpush1.msra.mxu0 0.0
    %431 = vmatprep.subr.mxu0 0.0
    %432 = vmatpush1.msra.mxu0 0.0
    %433 = vmatprep.subr.mxu0 0.0
    %434 = vmatpush1.msra.mxu0 0.0
    %435 = vmatprep.subr.mxu0 0.0
    %436 = vmatpush1.msra.mxu0 0.0
    %437 = vmatprep.subr.mxu0 0.0
    %438 = vmatpush1.msra.mxu0 0.0
    %439 = vmatprep.subr.mxu0 0.0
    %440 = vmatpush1.msra.mxu0 0.0
    %441 = vmatprep.subr.mxu0 0.0
    %442 = vmatpush1.msra.mxu0 0.0
    %443 = vmatprep.subr.mxu0 0.0
    %444 = vmatpush1.msra.mxu0 0.0
    %445 = vmatprep.subr.mxu0 0.0
    %446 = vmatpush1.msra.mxu0 0.0
    %447 = vmatprep.subr.mxu0 0.0
    %448 = vmatpush1.msra.mxu0 0.0
    %449 = vmatprep.subr.mxu0 0.0
    %450 = vmatpush1.msra.mxu0 0.0
    %451 = vmatprep.subr.mxu0 0.0
    %452 = vmatpush1.msra.mxu0 0.0
    %453 = vmatprep.subr.mxu0 0.0
    %454 = vmatpush1.msra.mxu0 0.0
    %455 = vmatprep.subr.mxu0 0.0
    %456 = vmatpush1.msra.mxu0 0.0
    %457 = vmatprep.subr.mxu0 0.0
    %458 = vmatpush1.msra.mxu0 0.0
    %459 = vmatprep.subr.mxu0 0.0
    %460 = vmatpush1.msra.mxu0 0.0
    %461 = vmatprep.subr.mxu0 0.0
    %462 = vmatpush1.msra.mxu0 0.0
    %463 = vmatprep.subr.mxu0 0.0
    %464 = vmatpush1.msra.mxu0 0.0
    %465 = vmatprep.mubr.f32.mxu0 0.0
    %466 = vmatmul.mubr.f32.gmra.mrb[0].mxu0 %v399
    %v467 = vpop.f32.mrb[0].mxu0
    %v468 = vadd.f32 0.0, %v467
    %v469 = vpop.f32.mrb[0].mxu0
    %470 = vdwg.mxu0
    %471 = vrot.lane.b32.xlu0 %v207, 64
    %v472 = vpop.permute.xlu0 %471
    %v475 = vsel %vm217, %v394, 0
    %477 = vmatprep.subr.mxu0 0.0
    %478 = vmatpush1.msra.mxu0 %v472
    %479 = vmatprep.subr.mxu0 0.0
    %480 = vmatpush1.msra.mxu0 0.0
    %481 = vmatprep.subr.mxu0 0.0
    %482 = vmatpush1.msra.mxu0 0.0
    %483 = vmatprep.subr.mxu0 0.0
    %484 = vmatpush1.msra.mxu0 0.0
    %485 = vmatprep.subr.mxu0 0.0
    %486 = vmatpush1.msra.mxu0 0.0
    %487 = vmatprep.subr.mxu0 0.0
    %488 = vmatpush1.msra.mxu0 0.0
    %489 = vmatprep.subr.mxu0 0.0
    %490 = vmatpush1.msra.mxu0 0.0
    %491 = vmatprep.subr.mxu0 0.0
    %492 = vmatpush1.msra.mxu0 0.0
    %493 = vmatprep.subr.mxu0 0.0
    %494 = vmatpush1.msra.mxu0 0.0
    %495 = vmatprep.subr.mxu0 0.0
    %496 = vmatpush1.msra.mxu0 0.0
    %497 = vmatprep.subr.mxu0 0.0
    %498 = vmatpush1.msra.mxu0 0.0
    %499 = vmatprep.subr.mxu0 0.0
    %500 = vmatpush1.msra.mxu0 0.0
    %501 = vmatprep.subr.mxu0 0.0
    %502 = vmatpush1.msra.mxu0 0.0
    %503 = vmatprep.subr.mxu0 0.0
    %504 = vmatpush1.msra.mxu0 0.0
    %505 = vmatprep.subr.mxu0 0.0
    %506 = vmatpush1.msra.mxu0 0.0
    %507 = vmatprep.subr.mxu0 0.0
    %508 = vmatpush1.msra.mxu0 0.0
    %509 = vmatprep.subr.mxu0 0.0
    %510 = vmatpush1.msra.mxu0 0.0
    %511 = vmatprep.subr.mxu0 0.0
    %512 = vmatpush1.msra.mxu0 0.0
    %513 = vmatprep.subr.mxu0 0.0
    %514 = vmatpush1.msra.mxu0 0.0
    %515 = vmatprep.subr.mxu0 0.0
    %516 = vmatpush1.msra.mxu0 0.0
    %517 = vmatprep.subr.mxu0 0.0
    %518 = vmatpush1.msra.mxu0 0.0
    %519 = vmatprep.subr.mxu0 0.0
    %520 = vmatpush1.msra.mxu0 0.0
    %521 = vmatprep.subr.mxu0 0.0
    %522 = vmatpush1.msra.mxu0 0.0
    %523 = vmatprep.subr.mxu0 0.0
    %524 = vmatpush1.msra.mxu0 0.0
    %525 = vmatprep.subr.mxu0 0.0
    %526 = vmatpush1.msra.mxu0 0.0
    %527 = vmatprep.subr.mxu0 0.0
    %528 = vmatpush1.msra.mxu0 0.0
    %529 = vmatprep.subr.mxu0 0.0
    %530 = vmatpush1.msra.mxu0 0.0
    %531 = vmatprep.subr.mxu0 0.0
    %532 = vmatpush1.msra.mxu0 0.0
    %533 = vmatprep.subr.mxu0 0.0
    %534 = vmatpush1.msra.mxu0 0.0
    %535 = vmatprep.subr.mxu0 0.0
    %536 = vmatpush1.msra.mxu0 0.0
    %537 = vmatprep.subr.mxu0 0.0
    %538 = vmatpush1.msra.mxu0 0.0
    %539 = vmatprep.subr.mxu0 0.0
    %540 = vmatpush1.msra.mxu0 0.0
    %541 = vmatprep.mubr.f32.mxu0 0.0
    %542 = vmatmul.mubr.f32.gmra.mrb[0].mxu0 %v475
    %v543 = vpop.f32.mrb[0].mxu0
    %v544 = vadd.f32 0.0, %v543
    %v545 = vpop.f32.mrb[0].mxu0
    %546 = vdwg.mxu0
    %547 = vst.msk [vmem:[#allocation2] sm:$0xff] %vm217, %v468
    %548 = vst.msk [vmem:[#allocation2 + $0x8] sm:$0xff] %vm217, %v544
    %549 = vrot.lane.b32.xlu0 %v202, 120
    %v550 = vpop.permute.xlu0 %549
    %551 = vrot.lane.b32.xlu0 %v202, 88
    %v552 = vpop.permute.xlu0 %551
    %v553 = vsel %vm217, %v550, 0
    %v555 = vsel %vm217, %v552, 0
    %557 = vmatprep.subr.mxu0 0.0
    %558 = vmatpush1.xpose.msra.mxu0 %v555
    %559 = vmatprep.subr.mxu0 0.0
    %560 = vmatpush1.xpose.msra.mxu0 0.0
    %561 = vmatprep.subr.mxu0 0.0
    %562 = vmatpush1.xpose.msra.mxu0 0.0
    %563 = vmatprep.subr.mxu0 0.0
    %564 = vmatpush1.xpose.msra.mxu0 0.0
    %565 = vmatprep.subr.mxu0 0.0
    %566 = vmatpush1.xpose.msra.mxu0 0.0
    %567 = vmatprep.subr.mxu0 0.0
    %568 = vmatpush1.xpose.msra.mxu0 0.0
    %569 = vmatprep.subr.mxu0 0.0
    %570 = vmatpush1.xpose.msra.mxu0 0.0
    %571 = vmatprep.subr.mxu0 0.0
    %572 = vmatpush1.xpose.msra.mxu0 0.0
    %573 = vmatprep.subr.mxu0 0.0
    %574 = vmatpush1.xpose.msra.mxu0 0.0
    %575 = vmatprep.subr.mxu0 0.0
    %576 = vmatpush1.xpose.msra.mxu0 0.0
    %577 = vmatprep.subr.mxu0 0.0
    %578 = vmatpush1.xpose.msra.mxu0 0.0
    %579 = vmatprep.subr.mxu0 0.0
    %580 = vmatpush1.xpose.msra.mxu0 0.0
    %581 = vmatprep.subr.mxu0 0.0
    %582 = vmatpush1.xpose.msra.mxu0 0.0
    %583 = vmatprep.subr.mxu0 0.0
    %584 = vmatpush1.xpose.msra.mxu0 0.0
    %585 = vmatprep.subr.mxu0 0.0
    %586 = vmatpush1.xpose.msra.mxu0 0.0
    %587 = vmatprep.subr.mxu0 0.0
    %588 = vmatpush1.xpose.msra.mxu0 0.0
    %589 = vmatprep.subr.mxu0 0.0
    %590 = vmatpush1.xpose.msra.mxu0 0.0
    %591 = vmatprep.subr.mxu0 0.0
    %592 = vmatpush1.xpose.msra.mxu0 0.0
    %593 = vmatprep.subr.mxu0 0.0
    %594 = vmatpush1.xpose.msra.mxu0 0.0
    %595 = vmatprep.subr.mxu0 0.0
    %596 = vmatpush1.xpose.msra.mxu0 0.0
    %597 = vmatprep.subr.mxu0 0.0
    %598 = vmatpush1.xpose.msra.mxu0 0.0
    %599 = vmatprep.subr.mxu0 0.0
    %600 = vmatpush1.xpose.msra.mxu0 0.0
    %601 = vmatprep.subr.mxu0 0.0
    %602 = vmatpush1.xpose.msra.mxu0 0.0
    %603 = vmatprep.subr.mxu0 0.0
    %604 = vmatpush1.xpose.msra.mxu0 0.0
    %605 = vmatprep.subr.mxu0 0.0
    %606 = vmatpush1.xpose.msra.mxu0 0.0
    %607 = vmatprep.subr.mxu0 0.0
    %608 = vmatpush1.xpose.msra.mxu0 0.0
    %609 = vmatprep.subr.mxu0 0.0
    %610 = vmatpush1.xpose.msra.mxu0 0.0
    %611 = vmatprep.subr.mxu0 0.0
    %612 = vmatpush1.xpose.msra.mxu0 0.0
    %613 = vmatprep.subr.mxu0 0.0
    %614 = vmatpush1.xpose.msra.mxu0 0.0
    %615 = vmatprep.subr.mxu0 0.0
    %616 = vmatpush1.xpose.msra.mxu0 0.0
    %617 = vmatprep.subr.mxu0 0.0
    %618 = vmatpush1.xpose.msra.mxu0 0.0
    %619 = vmatprep.subr.mxu0 0.0
    %620 = vmatpush1.xpose.msra.mxu0 0.0
    %621 = vmatprep.mubr.f32.mxu0 0.0
    %622 = vmatmul.mubr.f32.gmra.mrb[0].mxu0 %v553
    %v623 = vpop.f32.mrb[0].mxu0
    %v624 = vadd.f32 0.0, %v623
    %v625 = vpop.f32.mrb[0].mxu0
    %626 = vdwg.mxu0
    %627 = vrot.lane.b32.xlu0 %v207, 120
    %v628 = vpop.permute.xlu0 %627
    %629 = vrot.lane.b32.xlu0 %v207, 88
    %v630 = vpop.permute.xlu0 %629
    %v631 = vsel %vm217, %v628, 0
    %v633 = vsel %vm217, %v630, 0
    %635 = vmatprep.subr.mxu0 0.0
    %636 = vmatpush1.xpose.msra.mxu0 %v633
    %637 = vmatprep.subr.mxu0 0.0
    %638 = vmatpush1.xpose.msra.mxu0 0.0
    %639 = vmatprep.subr.mxu0 0.0
    %640 = vmatpush1.xpose.msra.mxu0 0.0
    %641 = vmatprep.subr.mxu0 0.0
    %642 = vmatpush1.xpose.msra.mxu0 0.0
    %643 = vmatprep.subr.mxu0 0.0
    %644 = vmatpush1.xpose.msra.mxu0 0.0
    %645 = vmatprep.subr.mxu0 0.0
    %646 = vmatpush1.xpose.msra.mxu0 0.0
    %647 = vmatprep.subr.mxu0 0.0
    %648 = vmatpush1.xpose.msra.mxu0 0.0
    %649 = vmatprep.subr.mxu0 0.0
    %650 = vmatpush1.xpose.msra.mxu0 0.0
    %651 = vmatprep.subr.mxu0 0.0
    %652 = vmatpush1.xpose.msra.mxu0 0.0
    %653 = vmatprep.subr.mxu0 0.0
    %654 = vmatpush1.xpose.msra.mxu0 0.0
    %655 = vmatprep.subr.mxu0 0.0
    %656 = vmatpush1.xpose.msra.mxu0 0.0
    %657 = vmatprep.subr.mxu0 0.0
    %658 = vmatpush1.xpose.msra.mxu0 0.0
    %659 = vmatprep.subr.mxu0 0.0
    %660 = vmatpush1.xpose.msra.mxu0 0.0
    %661 = vmatprep.subr.mxu0 0.0
    %662 = vmatpush1.xpose.msra.mxu0 0.0
    %663 = vmatprep.subr.mxu0 0.0
    %664 = vmatpush1.xpose.msra.mxu0 0.0
    %665 = vmatprep.subr.mxu0 0.0
    %666 = vmatpush1.xpose.msra.mxu0 0.0
    %667 = vmatprep.subr.mxu0 0.0
    %668 = vmatpush1.xpose.msra.mxu0 0.0
    %669 = vmatprep.subr.mxu0 0.0
    %670 = vmatpush1.xpose.msra.mxu0 0.0
    %671 = vmatprep.subr.mxu0 0.0
    %672 = vmatpush1.xpose.msra.mxu0 0.0
    %673 = vmatprep.subr.mxu0 0.0
    %674 = vmatpush1.xpose.msra.mxu0 0.0
    %675 = vmatprep.subr.mxu0 0.0
    %676 = vmatpush1.xpose.msra.mxu0 0.0
    %677 = vmatprep.subr.mxu0 0.0
    %678 = vmatpush1.xpose.msra.mxu0 0.0
    %679 = vmatprep.subr.mxu0 0.0
    %680 = vmatpush1.xpose.msra.mxu0 0.0
    %681 = vmatprep.subr.mxu0 0.0
    %682 = vmatpush1.xpose.msra.mxu0 0.0
    %683 = vmatprep.subr.mxu0 0.0
    %684 = vmatpush1.xpose.msra.mxu0 0.0
    %685 = vmatprep.subr.mxu0 0.0
    %686 = vmatpush1.xpose.msra.mxu0 0.0
    %687 = vmatprep.subr.mxu0 0.0
    %688 = vmatpush1.xpose.msra.mxu0 0.0
    %689 = vmatprep.subr.mxu0 0.0
    %690 = vmatpush1.xpose.msra.mxu0 0.0
    %691 = vmatprep.subr.mxu0 0.0
    %692 = vmatpush1.xpose.msra.mxu0 0.0
    %693 = vmatprep.subr.mxu0 0.0
    %694 = vmatpush1.xpose.msra.mxu0 0.0
    %695 = vmatprep.subr.mxu0 0.0
    %696 = vmatpush1.xpose.msra.mxu0 0.0
    %697 = vmatprep.subr.mxu0 0.0
    %698 = vmatpush1.xpose.msra.mxu0 0.0
    %699 = vmatprep.mubr.f32.mxu0 0.0
    %700 = vmatmul.mubr.f32.gmra.mrb[0].mxu0 %v631
    %v701 = vpop.f32.mrb[0].mxu0
    %v702 = vadd.f32 0.0, %v701
    %v703 = vpop.f32.mrb[0].mxu0
    %704 = vdwg.mxu0
    %v705 = vmul.f32 %v624, 0.35355338
    %v706 = vmul.f32 %v702, 0.35355338
    %v707 = vadd.f32 %v705, %v211
    %v708 = vadd.f32 %v706, %v211
    %v709 = vsel %vm217, %v707, -inf
    %710 = vmax.xlane.f32.xlu0 %v709
    %v711 = vpop.xlane.xlu0 %710
    %v712 = vsel %vm217, %v708, -inf
    %713 = vmax.xlane.f32.xlu0 %v712
    %v714 = vpop.xlane.xlu0 %713
    %v715 = vsub.f32 %v707, %v711
    %v716 = vsub.f32 %v708, %v714
    %v717 = vmul.f32 %v715, 1.442695
    %v718 = vpow.pop %v717
    %v719 = vmul.f32 %v716, 1.442695
    %v720 = vpow.pop %v719
    %v721 = vsel %vm217, %v718, 0.0
    %722 = vadd.xlane.f32.xlu0 %v721
    %v723 = vpop.xlane.xlu0 %722
    %v724 = vsel %vm217, %v720, 0.0
    %725 = vadd.xlane.f32.xlu0 %v724
    %v726 = vpop.xlane.xlu0 %725
    %v727 = vrcp.pop %v723
    %v728 = vrcp.pop %v726
    %v729 = vmul.f32 %v718, %v727
    %v730 = vmul.f32 %v720, %v728
    %731 = vrot.lane.b32.xlu0 %v202, 56
    %v732 = vpop.permute.xlu0 %731
    %v735 = vsel %vm217, %v729, 0
    %737 = vmatprep.subr.mxu0 0.0
    %738 = vmatpush1.msra.mxu0 %v732
    %739 = vmatprep.subr.mxu0 0.0
    %740 = vmatpush1.msra.mxu0 0.0
    %741 = vmatprep.subr.mxu0 0.0
    %742 = vmatpush1.msra.mxu0 0.0
    %743 = vmatprep.subr.mxu0 0.0
    %744 = vmatpush1.msra.mxu0 0.0
    %745 = vmatprep.subr.mxu0 0.0
    %746 = vmatpush1.msra.mxu0 0.0
    %747 = vmatprep.subr.mxu0 0.0
    %748 = vmatpush1.msra.mxu0 0.0
    %749 = vmatprep.subr.mxu0 0.0
    %750 = vmatpush1.msra.mxu0 0.0
    %751 = vmatprep.subr.mxu0 0.0
    %752 = vmatpush1.msra.mxu0 0.0
    %753 = vmatprep.subr.mxu0 0.0
    %754 = vmatpush1.msra.mxu0 0.0
    %755 = vmatprep.subr.mxu0 0.0
    %756 = vmatpush1.msra.mxu0 0.0
    %757 = vmatprep.subr.mxu0 0.0
    %758 = vmatpush1.msra.mxu0 0.0
    %759 = vmatprep.subr.mxu0 0.0
    %760 = vmatpush1.msra.mxu0 0.0
    %761 = vmatprep.subr.mxu0 0.0
    %762 = vmatpush1.msra.mxu0 0.0
    %763 = vmatprep.subr.mxu0 0.0
    %764 = vmatpush1.msra.mxu0 0.0
    %765 = vmatprep.subr.mxu0 0.0
    %766 = vmatpush1.msra.mxu0 0.0
    %767 = vmatprep.subr.mxu0 0.0
    %768 = vmatpush1.msra.mxu0 0.0
    %769 = vmatprep.subr.mxu0 0.0
    %770 = vmatpush1.msra.mxu0 0.0
    %771 = vmatprep.subr.mxu0 0.0
    %772 = vmatpush1.msra.mxu0 0.0
    %773 = vmatprep.subr.mxu0 0.0
    %774 = vmatpush1.msra.mxu0 0.0
    %775 = vmatprep.subr.mxu0 0.0
    %776 = vmatpush1.msra.mxu0 0.0
    %777 = vmatprep.subr.mxu0 0.0
    %778 = vmatpush1.msra.mxu0 0.0
    %779 = vmatprep.subr.mxu0 0.0
    %780 = vmatpush1.msra.mxu0 0.0
    %781 = vmatprep.subr.mxu0 0.0
    %782 = vmatpush1.msra.mxu0 0.0
    %783 = vmatprep.subr.mxu0 0.0
    %784 = vmatpush1.msra.mxu0 0.0
    %785 = vmatprep.subr.mxu0 0.0
    %786 = vmatpush1.msra.mxu0 0.0
    %787 = vmatprep.subr.mxu0 0.0
    %788 = vmatpush1.msra.mxu0 0.0
    %789 = vmatprep.subr.mxu0 0.0
    %790 = vmatpush1.msra.mxu0 0.0
    %791 = vmatprep.subr.mxu0 0.0
    %792 = vmatpush1.msra.mxu0 0.0
    %793 = vmatprep.subr.mxu0 0.0
    %794 = vmatpush1.msra.mxu0 0.0
    %795 = vmatprep.subr.mxu0 0.0
    %796 = vmatpush1.msra.mxu0 0.0
    %797 = vmatprep.subr.mxu0 0.0
    %798 = vmatpush1.msra.mxu0 0.0
    %799 = vmatprep.subr.mxu0 0.0
    %800 = vmatpush1.msra.mxu0 0.0
    %801 = vmatprep.mubr.f32.mxu0 0.0
    %802 = vmatmul.mubr.f32.gmra.mrb[0].mxu0 %v735
    %v803 = vpop.f32.mrb[0].mxu0
    %v804 = vadd.f32 0.0, %v803
    %v805 = vpop.f32.mrb[0].mxu0
    %806 = vdwg.mxu0
    %807 = vrot.lane.b32.xlu0 %v207, 56
    %v808 = vpop.permute.xlu0 %807
    %v811 = vsel %vm217, %v730, 0
    %813 = vmatprep.subr.mxu0 0.0
    %814 = vmatpush1.msra.mxu0 %v808
    %815 = vmatprep.subr.mxu0 0.0
    %816 = vmatpush1.msra.mxu0 0.0
    %817 = vmatprep.subr.mxu0 0.0
    %818 = vmatpush1.msra.mxu0 0.0
    %819 = vmatprep.subr.mxu0 0.0
    %820 = vmatpush1.msra.mxu0 0.0
    %821 = vmatprep.subr.mxu0 0.0
    %822 = vmatpush1.msra.mxu0 0.0
    %823 = vmatprep.subr.mxu0 0.0
    %824 = vmatpush1.msra.mxu0 0.0
    %825 = vmatprep.subr.mxu0 0.0
    %826 = vmatpush1.msra.mxu0 0.0
    %827 = vmatprep.subr.mxu0 0.0
    %828 = vmatpush1.msra.mxu0 0.0
    %829 = vmatprep.subr.mxu0 0.0
    %830 = vmatpush1.msra.mxu0 0.0
    %831 = vmatprep.subr.mxu0 0.0
    %832 = vmatpush1.msra.mxu0 0.0
    %833 = vmatprep.subr.mxu0 0.0
    %834 = vmatpush1.msra.mxu0 0.0
    %835 = vmatprep.subr.mxu0 0.0
    %836 = vmatpush1.msra.mxu0 0.0
    %837 = vmatprep.subr.mxu0 0.0
    %838 = vmatpush1.msra.mxu0 0.0
    %839 = vmatprep.subr.mxu0 0.0
    %840 = vmatpush1.msra.mxu0 0.0
    %841 = vmatprep.subr.mxu0 0.0
    %842 = vmatpush1.msra.mxu0 0.0
    %843 = vmatprep.subr.mxu0 0.0
    %844 = vmatpush1.msra.mxu0 0.0
    %845 = vmatprep.subr.mxu0 0.0
    %846 = vmatpush1.msra.mxu0 0.0
    %847 = vmatprep.subr.mxu0 0.0
    %848 = vmatpush1.msra.mxu0 0.0
    %849 = vmatprep.subr.mxu0 0.0
    %850 = vmatpush1.msra.mxu0 0.0
    %851 = vmatprep.subr.mxu0 0.0
    %852 = vmatpush1.msra.mxu0 0.0
    %853 = vmatprep.subr.mxu0 0.0
    %854 = vmatpush1.msra.mxu0 0.0
    %855 = vmatprep.subr.mxu0 0.0
    %856 = vmatpush1.msra.mxu0 0.0
    %857 = vmatprep.subr.mxu0 0.0
    %858 = vmatpush1.msra.mxu0 0.0
    %859 = vmatprep.subr.mxu0 0.0
    %860 = vmatpush1.msra.mxu0 0.0
    %861 = vmatprep.subr.mxu0 0.0
    %862 = vmatpush1.msra.mxu0 0.0
    %863 = vmatprep.subr.mxu0 0.0
    %864 = vmatpush1.msra.mxu0 0.0
    %865 = vmatprep.subr.mxu0 0.0
    %866 = vmatpush1.msra.mxu0 0.0
    %867 = vmatprep.subr.mxu0 0.0
    %868 = vmatpush1.msra.mxu0 0.0
    %869 = vmatprep.subr.mxu0 0.0
    %870 = vmatpush1.msra.mxu0 0.0
    %871 = vmatprep.subr.mxu0 0.0
    %872 = vmatpush1.msra.mxu0 0.0
    %873 = vmatprep.subr.mxu0 0.0
    %874 = vmatpush1.msra.mxu0 0.0
    %875 = vmatprep.subr.mxu0 0.0
    %876 = vmatpush1.msra.mxu0 0.0
    %877 = vmatprep.mubr.f32.mxu0 0.0
    %878 = vmatmul.mubr.f32.gmra.mrb[0].mxu0 %v811
    %v879 = vpop.f32.mrb[0].mxu0
    %v880 = vadd.f32 0.0, %v879
    %v881 = vpop.f32.mrb[0].mxu0
    %882 = vdwg.mxu0
    %885 = vrot.lane.b32.xlu0 %v804, 8
    %v886 = vpop.permute.xlu0 %885
    %887 = vrot.lane.b32.xlu0 %v880, 8
    %v888 = vpop.permute.xlu0 %887
    %vm891 = vcmask 130112
    %892 = vst.msk [vmem:[#allocation2] sm:$0xff] %vm891, %v886
    %893 = vst.msk [vmem:[#allocation2 + $0x8] sm:$0xff] %vm891, %v888
    %894 = vrot.lane.b32.xlu0 %v202, 112
    %v895 = vpop.permute.xlu0 %894
    %896 = vrot.lane.b32.xlu0 %v202, 80
    %v897 = vpop.permute.xlu0 %896
    %v898 = vsel %vm217, %v895, 0
    %v900 = vsel %vm217, %v897, 0
    %902 = vmatprep.subr.mxu0 0.0
    %903 = vmatpush1.xpose.msra.mxu0 %v900
    %904 = vmatprep.subr.mxu0 0.0
    %905 = vmatpush1.xpose.msra.mxu0 0.0
    %906 = vmatprep.subr.mxu0 0.0
    %907 = vmatpush1.xpose.msra.mxu0 0.0
    %908 = vmatprep.subr.mxu0 0.0
    %909 = vmatpush1.xpose.msra.mxu0 0.0
    %910 = vmatprep.subr.mxu0 0.0
    %911 = vmatpush1.xpose.msra.mxu0 0.0
    %912 = vmatprep.subr.mxu0 0.0
    %913 = vmatpush1.xpose.msra.mxu0 0.0
    %914 = vmatprep.subr.mxu0 0.0
    %915 = vmatpush1.xpose.msra.mxu0 0.0
    %916 = vmatprep.subr.mxu0 0.0
    %917 = vmatpush1.xpose.msra.mxu0 0.0
    %918 = vmatprep.subr.mxu0 0.0
    %919 = vmatpush1.xpose.msra.mxu0 0.0
    %920 = vmatprep.subr.mxu0 0.0
    %921 = vmatpush1.xpose.msra.mxu0 0.0
    %922 = vmatprep.subr.mxu0 0.0
    %923 = vmatpush1.xpose.msra.mxu0 0.0
    %924 = vmatprep.subr.mxu0 0.0
    %925 = vmatpush1.xpose.msra.mxu0 0.0
    %926 = vmatprep.subr.mxu0 0.0
    %927 = vmatpush1.xpose.msra.mxu0 0.0
    %928 = vmatprep.subr.mxu0 0.0
    %929 = vmatpush1.xpose.msra.mxu0 0.0
    %930 = vmatprep.subr.mxu0 0.0
    %931 = vmatpush1.xpose.msra.mxu0 0.0
    %932 = vmatprep.subr.mxu0 0.0
    %933 = vmatpush1.xpose.msra.mxu0 0.0
    %934 = vmatprep.subr.mxu0 0.0
    %935 = vmatpush1.xpose.msra.mxu0 0.0
    %936 = vmatprep.subr.mxu0 0.0
    %937 = vmatpush1.xpose.msra.mxu0 0.0
    %938 = vmatprep.subr.mxu0 0.0
    %939 = vmatpush1.xpose.msra.mxu0 0.0
    %940 = vmatprep.subr.mxu0 0.0
    %941 = vmatpush1.xpose.msra.mxu0 0.0
    %942 = vmatprep.subr.mxu0 0.0
    %943 = vmatpush1.xpose.msra.mxu0 0.0
    %944 = vmatprep.subr.mxu0 0.0
    %945 = vmatpush1.xpose.msra.mxu0 0.0
    %946 = vmatprep.subr.mxu0 0.0
    %947 = vmatpush1.xpose.msra.mxu0 0.0
    %948 = vmatprep.subr.mxu0 0.0
    %949 = vmatpush1.xpose.msra.mxu0 0.0
    %950 = vmatprep.subr.mxu0 0.0
    %951 = vmatpush1.xpose.msra.mxu0 0.0
    %952 = vmatprep.subr.mxu0 0.0
    %953 = vmatpush1.xpose.msra.mxu0 0.0
    %954 = vmatprep.subr.mxu0 0.0
    %955 = vmatpush1.xpose.msra.mxu0 0.0
    %956 = vmatprep.subr.mxu0 0.0
    %957 = vmatpush1.xpose.msra.mxu0 0.0
    %958 = vmatprep.subr.mxu0 0.0
    %959 = vmatpush1.xpose.msra.mxu0 0.0
    %960 = vmatprep.subr.mxu0 0.0
    %961 = vmatpush1.xpose.msra.mxu0 0.0
    %962 = vmatprep.subr.mxu0 0.0
    %963 = vmatpush1.xpose.msra.mxu0 0.0
    %964 = vmatprep.subr.mxu0 0.0
    %965 = vmatpush1.xpose.msra.mxu0 0.0
    %966 = vmatprep.mubr.f32.mxu0 0.0
    %967 = vmatmul.mubr.f32.gmra.mrb[0].mxu0 %v898
    %v968 = vpop.f32.mrb[0].mxu0
    %v969 = vadd.f32 0.0, %v968
    %v970 = vpop.f32.mrb[0].mxu0
    %971 = vdwg.mxu0
    %972 = vrot.lane.b32.xlu0 %v207, 112
    %v973 = vpop.permute.xlu0 %972
    %974 = vrot.lane.b32.xlu0 %v207, 80
    %v975 = vpop.permute.xlu0 %974
    %v976 = vsel %vm217, %v973, 0
    %v978 = vsel %vm217, %v975, 0
    %980 = vmatprep.subr.mxu0 0.0
    %981 = vmatpush1.xpose.msra.mxu0 %v978
    %982 = vmatprep.subr.mxu0 0.0
    %983 = vmatpush1.xpose.msra.mxu0 0.0
    %984 = vmatprep.subr.mxu0 0.0
    %985 = vmatpush1.xpose.msra.mxu0 0.0
    %986 = vmatprep.subr.mxu0 0.0
    %987 = vmatpush1.xpose.msra.mxu0 0.0
    %988 = vmatprep.subr.mxu0 0.0
    %989 = vmatpush1.xpose.msra.mxu0 0.0
    %990 = vmatprep.subr.mxu0 0.0
    %991 = vmatpush1.xpose.msra.mxu0 0.0
    %992 = vmatprep.subr.mxu0 0.0
    %993 = vmatpush1.xpose.msra.mxu0 0.0
    %994 = vmatprep.subr.mxu0 0.0
    %995 = vmatpush1.xpose.msra.mxu0 0.0
    %996 = vmatprep.subr.mxu0 0.0
    %997 = vmatpush1.xpose.msra.mxu0 0.0
    %998 = vmatprep.subr.mxu0 0.0
    %999 = vmatpush1.xpose.msra.mxu0 0.0
    %1000 = vmatprep.subr.mxu0 0.0
    %1001 = vmatpush1.xpose.msra.mxu0 0.0
    %1002 = vmatprep.subr.mxu0 0.0
    %1003 = vmatpush1.xpose.msra.mxu0 0.0
    %1004 = vmatprep.subr.mxu0 0.0
    %1005 = vmatpush1.xpose.msra.mxu0 0.0
    %1006 = vmatprep.subr.mxu0 0.0
    %1007 = vmatpush1.xpose.msra.mxu0 0.0
    %1008 = vmatprep.subr.mxu0 0.0
    %1009 = vmatpush1.xpose.msra.mxu0 0.0
    %1010 = vmatprep.subr.mxu0 0.0
    %1011 = vmatpush1.xpose.msra.mxu0 0.0
    %1012 = vmatprep.subr.mxu0 0.0
    %1013 = vmatpush1.xpose.msra.mxu0 0.0
    %1014 = vmatprep.subr.mxu0 0.0
    %1015 = vmatpush1.xpose.msra.mxu0 0.0
    %1016 = vmatprep.subr.mxu0 0.0
    %1017 = vmatpush1.xpose.msra.mxu0 0.0
    %1018 = vmatprep.subr.mxu0 0.0
    %1019 = vmatpush1.xpose.msra.mxu0 0.0
    %1020 = vmatprep.subr.mxu0 0.0
    %1021 = vmatpush1.xpose.msra.mxu0 0.0
    %1022 = vmatprep.subr.mxu0 0.0
    %1023 = vmatpush1.xpose.msra.mxu0 0.0
    %1024 = vmatprep.subr.mxu0 0.0
    %1025 = vmatpush1.xpose.msra.mxu0 0.0
    %1026 = vmatprep.subr.mxu0 0.0
    %1027 = vmatpush1.xpose.msra.mxu0 0.0
    %1028 = vmatprep.subr.mxu0 0.0
    %1029 = vmatpush1.xpose.msra.mxu0 0.0
    %1030 = vmatprep.subr.mxu0 0.0
    %1031 = vmatpush1.xpose.msra.mxu0 0.0
    %1032 = vmatprep.subr.mxu0 0.0
    %1033 = vmatpush1.xpose.msra.mxu0 0.0
    %1034 = vmatprep.subr.mxu0 0.0
    %1035 = vmatpush1.xpose.msra.mxu0 0.0
    %1036 = vmatprep.subr.mxu0 0.0
    %1037 = vmatpush1.xpose.msra.mxu0 0.0
    %1038 = vmatprep.subr.mxu0 0.0
    %1039 = vmatpush1.xpose.msra.mxu0 0.0
    %1040 = vmatprep.subr.mxu0 0.0
    %1041 = vmatpush1.xpose.msra.mxu0 0.0
    %1042 = vmatprep.subr.mxu0 0.0
    %1043 = vmatpush1.xpose.msra.mxu0 0.0
    %1044 = vmatprep.mubr.f32.mxu0 0.0
    %1045 = vmatmul.mubr.f32.gmra.mrb[0].mxu0 %v976
    %v1046 = vpop.f32.mrb[0].mxu0
    %v1047 = vadd.f32 0.0, %v1046
    %v1048 = vpop.f32.mrb[0].mxu0
    %1049 = vdwg.mxu0
    %v1050 = vmul.f32 %v969, 0.35355338
    %v1051 = vmul.f32 %v1047, 0.35355338
    %v1052 = vadd.f32 %v1050, %v212
    %v1053 = vadd.f32 %v1051, %v212
    %v1054 = vsel %vm217, %v1052, -inf
    %1055 = vmax.xlane.f32.xlu0 %v1054
    %v1056 = vpop.xlane.xlu0 %1055
    %v1057 = vsel %vm217, %v1053, -inf
    %1058 = vmax.xlane.f32.xlu0 %v1057
    %v1059 = vpop.xlane.xlu0 %1058
    %v1060 = vsub.f32 %v1052, %v1056
    %v1061 = vsub.f32 %v1053, %v1059
    %v1062 = vmul.f32 %v1060, 1.442695
    %v1063 = vpow.pop %v1062
    %v1064 = vmul.f32 %v1061, 1.442695
    %v1065 = vpow.pop %v1064
    %v1066 = vsel %vm217, %v1063, 0.0
    %1067 = vadd.xlane.f32.xlu0 %v1066
    %v1068 = vpop.xlane.xlu0 %1067
    %v1069 = vsel %vm217, %v1065, 0.0
    %1070 = vadd.xlane.f32.xlu0 %v1069
    %v1071 = vpop.xlane.xlu0 %1070
    %v1072 = vrcp.pop %v1068
    %v1073 = vrcp.pop %v1071
    %v1074 = vmul.f32 %v1063, %v1072
    %v1075 = vmul.f32 %v1065, %v1073
    %1076 = vrot.lane.b32.xlu0 %v202, 48
    %v1077 = vpop.permute.xlu0 %1076
    %v1080 = vsel %vm217, %v1074, 0
    %1082 = vmatprep.subr.mxu0 0.0
    %1083 = vmatpush1.msra.mxu0 %v1077
    %1084 = vmatprep.subr.mxu0 0.0
    %1085 = vmatpush1.msra.mxu0 0.0
    %1086 = vmatprep.subr.mxu0 0.0
    %1087 = vmatpush1.msra.mxu0 0.0
    %1088 = vmatprep.subr.mxu0 0.0
    %1089 = vmatpush1.msra.mxu0 0.0
    %1090 = vmatprep.subr.mxu0 0.0
    %1091 = vmatpush1.msra.mxu0 0.0
    %1092 = vmatprep.subr.mxu0 0.0
    %1093 = vmatpush1.msra.mxu0 0.0
    %1094 = vmatprep.subr.mxu0 0.0
    %1095 = vmatpush1.msra.mxu0 0.0
    %1096 = vmatprep.subr.mxu0 0.0
    %1097 = vmatpush1.msra.mxu0 0.0
    %1098 = vmatprep.subr.mxu0 0.0
    %1099 = vmatpush1.msra.mxu0 0.0
    %1100 = vmatprep.subr.mxu0 0.0
    %1101 = vmatpush1.msra.mxu0 0.0
    %1102 = vmatprep.subr.mxu0 0.0
    %1103 = vmatpush1.msra.mxu0 0.0
    %1104 = vmatprep.subr.mxu0 0.0
    %1105 = vmatpush1.msra.mxu0 0.0
    %1106 = vmatprep.subr.mxu0 0.0
    %1107 = vmatpush1.msra.mxu0 0.0
    %1108 = vmatprep.subr.mxu0 0.0
    %1109 = vmatpush1.msra.mxu0 0.0
    %1110 = vmatprep.subr.mxu0 0.0
    %1111 = vmatpush1.msra.mxu0 0.0
    %1112 = vmatprep.subr.mxu0 0.0
    %1113 = vmatpush1.msra.mxu0 0.0
    %1114 = vmatprep.subr.mxu0 0.0
    %1115 = vmatpush1.msra.mxu0 0.0
    %1116 = vmatprep.subr.mxu0 0.0
    %1117 = vmatpush1.msra.mxu0 0.0
    %1118 = vmatprep.subr.mxu0 0.0
    %1119 = vmatpush1.msra.mxu0 0.0
    %1120 = vmatprep.subr.mxu0 0.0
    %1121 = vmatpush1.msra.mxu0 0.0
    %1122 = vmatprep.subr.mxu0 0.0
    %1123 = vmatpush1.msra.mxu0 0.0
    %1124 = vmatprep.subr.mxu0 0.0
    %1125 = vmatpush1.msra.mxu0 0.0
    %1126 = vmatprep.subr.mxu0 0.0
    %1127 = vmatpush1.msra.mxu0 0.0
    %1128 = vmatprep.subr.mxu0 0.0
    %1129 = vmatpush1.msra.mxu0 0.0
    %1130 = vmatprep.subr.mxu0 0.0
    %1131 = vmatpush1.msra.mxu0 0.0
    %1132 = vmatprep.subr.mxu0 0.0
    %1133 = vmatpush1.msra.mxu0 0.0
    %1134 = vmatprep.subr.mxu0 0.0
    %1135 = vmatpush1.msra.mxu0 0.0
    %1136 = vmatprep.subr.mxu0 0.0
    %1137 = vmatpush1.msra.mxu0 0.0
    %1138 = vmatprep.subr.mxu0 0.0
    %1139 = vmatpush1.msra.mxu0 0.0
    %1140 = vmatprep.subr.mxu0 0.0
    %1141 = vmatpush1.msra.mxu0 0.0
    %1142 = vmatprep.subr.mxu0 0.0
    %1143 = vmatpush1.msra.mxu0 0.0
    %1144 = vmatprep.subr.mxu0 0.0
    %1145 = vmatpush1.msra.mxu0 0.0
    %1146 = vmatprep.mubr.f32.mxu0 0.0
    %1147 = vmatmul.mubr.f32.gmra.mrb[0].mxu0 %v1080
    %v1148 = vpop.f32.mrb[0].mxu0
    %v1149 = vadd.f32 0.0, %v1148
    %v1150 = vpop.f32.mrb[0].mxu0
    %1151 = vdwg.mxu0
    %1152 = vrot.lane.b32.xlu0 %v207, 48
    %v1153 = vpop.permute.xlu0 %1152
    %v1156 = vsel %vm217, %v1075, 0
    %1158 = vmatprep.subr.mxu0 0.0
    %1159 = vmatpush1.msra.mxu0 %v1153
    %1160 = vmatprep.subr.mxu0 0.0
    %1161 = vmatpush1.msra.mxu0 0.0
    %1162 = vmatprep.subr.mxu0 0.0
    %1163 = vmatpush1.msra.mxu0 0.0
    %1164 = vmatprep.subr.mxu0 0.0
    %1165 = vmatpush1.msra.mxu0 0.0
    %1166 = vmatprep.subr.mxu0 0.0
    %1167 = vmatpush1.msra.mxu0 0.0
    %1168 = vmatprep.subr.mxu0 0.0
    %1169 = vmatpush1.msra.mxu0 0.0
    %1170 = vmatprep.subr.mxu0 0.0
    %1171 = vmatpush1.msra.mxu0 0.0
    %1172 = vmatprep.subr.mxu0 0.0
    %1173 = vmatpush1.msra.mxu0 0.0
    %1174 = vmatprep.subr.mxu0 0.0
    %1175 = vmatpush1.msra.mxu0 0.0
    %1176 = vmatprep.subr.mxu0 0.0
    %1177 = vmatpush1.msra.mxu0 0.0
    %1178 = vmatprep.subr.mxu0 0.0
    %1179 = vmatpush1.msra.mxu0 0.0
    %1180 = vmatprep.subr.mxu0 0.0
    %1181 = vmatpush1.msra.mxu0 0.0
    %1182 = vmatprep.subr.mxu0 0.0
    %1183 = vmatpush1.msra.mxu0 0.0
    %1184 = vmatprep.subr.mxu0 0.0
    %1185 = vmatpush1.msra.mxu0 0.0
    %1186 = vmatprep.subr.mxu0 0.0
    %1187 = vmatpush1.msra.mxu0 0.0
    %1188 = vmatprep.subr.mxu0 0.0
    %1189 = vmatpush1.msra.mxu0 0.0
    %1190 = vmatprep.subr.mxu0 0.0
    %1191 = vmatpush1.msra.mxu0 0.0
    %1192 = vmatprep.subr.mxu0 0.0
    %1193 = vmatpush1.msra.mxu0 0.0
    %1194 = vmatprep.subr.mxu0 0.0
    %1195 = vmatpush1.msra.mxu0 0.0
    %1196 = vmatprep.subr.mxu0 0.0
    %1197 = vmatpush1.msra.mxu0 0.0
    %1198 = vmatprep.subr.mxu0 0.0
    %1199 = vmatpush1.msra.mxu0 0.0
    %1200 = vmatprep.subr.mxu0 0.0
    %1201 = vmatpush1.msra.mxu0 0.0
    %1202 = vmatprep.subr.mxu0 0.0
    %1203 = vmatpush1.msra.mxu0 0.0
    %1204 = vmatprep.subr.mxu0 0.0
    %1205 = vmatpush1.msra.mxu0 0.0
    %1206 = vmatprep.subr.mxu0 0.0
    %1207 = vmatpush1.msra.mxu0 0.0
    %1208 = vmatprep.subr.mxu0 0.0
    %1209 = vmatpush1.msra.mxu0 0.0
    %1210 = vmatprep.subr.mxu0 0.0
    %1211 = vmatpush1.msra.mxu0 0.0
    %1212 = vmatprep.subr.mxu0 0.0
    %1213 = vmatpush1.msra.mxu0 0.0
    %1214 = vmatprep.subr.mxu0 0.0
    %1215 = vmatpush1.msra.mxu0 0.0
    %1216 = vmatprep.subr.mxu0 0.0
    %1217 = vmatpush1.msra.mxu0 0.0
    %1218 = vmatprep.subr.mxu0 0.0
    %1219 = vmatpush1.msra.mxu0 0.0
    %1220 = vmatprep.subr.mxu0 0.0
    %1221 = vmatpush1.msra.mxu0 0.0
    %1222 = vmatprep.mubr.f32.mxu0 0.0
    %1223 = vmatmul.mubr.f32.gmra.mrb[0].mxu0 %v1156
    %v1224 = vpop.f32.mrb[0].mxu0
    %v1225 = vadd.f32 0.0, %v1224
    %v1226 = vpop.f32.mrb[0].mxu0
    %1227 = vdwg.mxu0
    %1230 = vrot.lane.b32.xlu0 %v1149, 16
    %v1231 = vpop.permute.xlu0 %1230
    %1232 = vrot.lane.b32.xlu0 %v1225, 16
    %v1233 = vpop.permute.xlu0 %1232
    %vm1236 = vcmask 195712
    %1237 = vst.msk [vmem:[#allocation2] sm:$0xff] %vm1236, %v1231
    %1238 = vst.msk [vmem:[#allocation2 + $0x8] sm:$0xff] %vm1236, %v1233
    %1239 = vrot.lane.b32.xlu0 %v202, 104
    %v1240 = vpop.permute.xlu0 %1239
    %1241 = vrot.lane.b32.xlu0 %v202, 72
    %v1242 = vpop.permute.xlu0 %1241
    %v1243 = vsel %vm217, %v1240, 0
    %v1245 = vsel %vm217, %v1242, 0
    %1247 = vmatprep.subr.mxu0 0.0
    %1248 = vmatpush1.xpose.msra.mxu0 %v1245
    %1249 = vmatprep.subr.mxu0 0.0
    %1250 = vmatpush1.xpose.msra.mxu0 0.0
    %1251 = vmatprep.subr.mxu0 0.0
    %1252 = vmatpush1.xpose.msra.mxu0 0.0
    %1253 = vmatprep.subr.mxu0 0.0
    %1254 = vmatpush1.xpose.msra.mxu0 0.0
    %1255 = vmatprep.subr.mxu0 0.0
    %1256 = vmatpush1.xpose.msra.mxu0 0.0
    %1257 = vmatprep.subr.mxu0 0.0
    %1258 = vmatpush1.xpose.msra.mxu0 0.0
    %1259 = vmatprep.subr.mxu0 0.0
    %1260 = vmatpush1.xpose.msra.mxu0 0.0
    %1261 = vmatprep.subr.mxu0 0.0
    %1262 = vmatpush1.xpose.msra.mxu0 0.0
    %1263 = vmatprep.subr.mxu0 0.0
    %1264 = vmatpush1.xpose.msra.mxu0 0.0
    %1265 = vmatprep.subr.mxu0 0.0
    %1266 = vmatpush1.xpose.msra.mxu0 0.0
    %1267 = vmatprep.subr.mxu0 0.0
    %1268 = vmatpush1.xpose.msra.mxu0 0.0
    %1269 = vmatprep.subr.mxu0 0.0
    %1270 = vmatpush1.xpose.msra.mxu0 0.0
    %1271 = vmatprep.subr.mxu0 0.0
    %1272 = vmatpush1.xpose.msra.mxu0 0.0
    %1273 = vmatprep.subr.mxu0 0.0
    %1274 = vmatpush1.xpose.msra.mxu0 0.0
    %1275 = vmatprep.subr.mxu0 0.0
    %1276 = vmatpush1.xpose.msra.mxu0 0.0
    %1277 = vmatprep.subr.mxu0 0.0
    %1278 = vmatpush1.xpose.msra.mxu0 0.0
    %1279 = vmatprep.subr.mxu0 0.0
    %1280 = vmatpush1.xpose.msra.mxu0 0.0
    %1281 = vmatprep.subr.mxu0 0.0
    %1282 = vmatpush1.xpose.msra.mxu0 0.0
    %1283 = vmatprep.subr.mxu0 0.0
    %1284 = vmatpush1.xpose.msra.mxu0 0.0
    %1285 = vmatprep.subr.mxu0 0.0
    %1286 = vmatpush1.xpose.msra.mxu0 0.0
    %1287 = vmatprep.subr.mxu0 0.0
    %1288 = vmatpush1.xpose.msra.mxu0 0.0
    %1289 = vmatprep.subr.mxu0 0.0
    %1290 = vmatpush1.xpose.msra.mxu0 0.0
    %1291 = vmatprep.subr.mxu0 0.0
    %1292 = vmatpush1.xpose.msra.mxu0 0.0
    %1293 = vmatprep.subr.mxu0 0.0
    %1294 = vmatpush1.xpose.msra.mxu0 0.0
    %1295 = vmatprep.subr.mxu0 0.0
    %1296 = vmatpush1.xpose.msra.mxu0 0.0
    %1297 = vmatprep.subr.mxu0 0.0
    %1298 = vmatpush1.xpose.msra.mxu0 0.0
    %1299 = vmatprep.subr.mxu0 0.0
    %1300 = vmatpush1.xpose.msra.mxu0 0.0
    %1301 = vmatprep.subr.mxu0 0.0
    %1302 = vmatpush1.xpose.msra.mxu0 0.0
    %1303 = vmatprep.subr.mxu0 0.0
    %1304 = vmatpush1.xpose.msra.mxu0 0.0
    %1305 = vmatprep.subr.mxu0 0.0
    %1306 = vmatpush1.xpose.msra.mxu0 0.0
    %1307 = vmatprep.subr.mxu0 0.0
    %1308 = vmatpush1.xpose.msra.mxu0 0.0
    %1309 = vmatprep.subr.mxu0 0.0
    %1310 = vmatpush1.xpose.msra.mxu0 0.0
    %1311 = vmatprep.mubr.f32.mxu0 0.0
    %1312 = vmatmul.mubr.f32.gmra.mrb[0].mxu0 %v1243
    %v1313 = vpop.f32.mrb[0].mxu0
    %v1314 = vadd.f32 0.0, %v1313
    %v1315 = vpop.f32.mrb[0].mxu0
    %1316 = vdwg.mxu0
    %1317 = vrot.lane.b32.xlu0 %v207, 104
    %v1318 = vpop.permute.xlu0 %1317
    %1319 = vrot.lane.b32.xlu0 %v207, 72
    %v1320 = vpop.permute.xlu0 %1319
    %v1321 = vsel %vm217, %v1318, 0
    %v1323 = vsel %vm217, %v1320, 0
    %1325 = vmatprep.subr.mxu0 0.0
    %1326 = vmatpush1.xpose.msra.mxu0 %v1323
    %1327 = vmatprep.subr.mxu0 0.0
    %1328 = vmatpush1.xpose.msra.mxu0 0.0
    %1329 = vmatprep.subr.mxu0 0.0
    %1330 = vmatpush1.xpose.msra.mxu0 0.0
    %1331 = vmatprep.subr.mxu0 0.0
    %1332 = vmatpush1.xpose.msra.mxu0 0.0
    %1333 = vmatprep.subr.mxu0 0.0
    %1334 = vmatpush1.xpose.msra.mxu0 0.0
    %1335 = vmatprep.subr.mxu0 0.0
    %1336 = vmatpush1.xpose.msra.mxu0 0.0
    %1337 = vmatprep.subr.mxu0 0.0
    %1338 = vmatpush1.xpose.msra.mxu0 0.0
    %1339 = vmatprep.subr.mxu0 0.0
    %1340 = vmatpush1.xpose.msra.mxu0 0.0
    %1341 = vmatprep.subr.mxu0 0.0
    %1342 = vmatpush1.xpose.msra.mxu0 0.0
    %1343 = vmatprep.subr.mxu0 0.0
    %1344 = vmatpush1.xpose.msra.mxu0 0.0
    %1345 = vmatprep.subr.mxu0 0.0
    %1346 = vmatpush1.xpose.msra.mxu0 0.0
    %1347 = vmatprep.subr.mxu0 0.0
    %1348 = vmatpush1.xpose.msra.mxu0 0.0
    %1349 = vmatprep.subr.mxu0 0.0
    %1350 = vmatpush1.xpose.msra.mxu0 0.0
    %1351 = vmatprep.subr.mxu0 0.0
    %1352 = vmatpush1.xpose.msra.mxu0 0.0
    %1353 = vmatprep.subr.mxu0 0.0
    %1354 = vmatpush1.xpose.msra.mxu0 0.0
    %1355 = vmatprep.subr.mxu0 0.0
    %1356 = vmatpush1.xpose.msra.mxu0 0.0
    %1357 = vmatprep.subr.mxu0 0.0
    %1358 = vmatpush1.xpose.msra.mxu0 0.0
    %1359 = vmatprep.subr.mxu0 0.0
    %1360 = vmatpush1.xpose.msra.mxu0 0.0
    %1361 = vmatprep.subr.mxu0 0.0
    %1362 = vmatpush1.xpose.msra.mxu0 0.0
    %1363 = vmatprep.subr.mxu0 0.0
    %1364 = vmatpush1.xpose.msra.mxu0 0.0
    %1365 = vmatprep.subr.mxu0 0.0
    %1366 = vmatpush1.xpose.msra.mxu0 0.0
    %1367 = vmatprep.subr.mxu0 0.0
    %1368 = vmatpush1.xpose.msra.mxu0 0.0
    %1369 = vmatprep.subr.mxu0 0.0
    %1370 = vmatpush1.xpose.msra.mxu0 0.0
    %1371 = vmatprep.subr.mxu0 0.0
    %1372 = vmatpush1.xpose.msra.mxu0 0.0
    %1373 = vmatprep.subr.mxu0 0.0
    %1374 = vmatpush1.xpose.msra.mxu0 0.0
    %1375 = vmatprep.subr.mxu0 0.0
    %1376 = vmatpush1.xpose.msra.mxu0 0.0
    %1377 = vmatprep.subr.mxu0 0.0
    %1378 = vmatpush1.xpose.msra.mxu0 0.0
    %1379 = vmatprep.subr.mxu0 0.0
    %1380 = vmatpush1.xpose.msra.mxu0 0.0
    %1381 = vmatprep.subr.mxu0 0.0
    %1382 = vmatpush1.xpose.msra.mxu0 0.0
    %1383 = vmatprep.subr.mxu0 0.0
    %1384 = vmatpush1.xpose.msra.mxu0 0.0
    %1385 = vmatprep.subr.mxu0 0.0
    %1386 = vmatpush1.xpose.msra.mxu0 0.0
    %1387 = vmatprep.subr.mxu0 0.0
    %1388 = vmatpush1.xpose.msra.mxu0 0.0
    %1389 = vmatprep.mubr.f32.mxu0 0.0
    %1390 = vmatmul.mubr.f32.gmra.mrb[0].mxu0 %v1321
    %v1391 = vpop.f32.mrb[0].mxu0
    %v1392 = vadd.f32 0.0, %v1391
    %v1393 = vpop.f32.mrb[0].mxu0
    %1394 = vdwg.mxu0
    %v1395 = vmul.f32 %v1314, 0.35355338
    %v1396 = vmul.f32 %v1392, 0.35355338
    %v1397 = vadd.f32 %v1395, %v213
    %v1398 = vadd.f32 %v1396, %v213
    %v1399 = vsel %vm217, %v1397, -inf
    %1400 = vmax.xlane.f32.xlu0 %v1399
    %v1401 = vpop.xlane.xlu0 %1400
    %v1402 = vsel %vm217, %v1398, -inf
    %1403 = vmax.xlane.f32.xlu0 %v1402
    %v1404 = vpop.xlane.xlu0 %1403
    %v1405 = vsub.f32 %v1397, %v1401
    %v1406 = vsub.f32 %v1398, %v1404
    %v1407 = vmul.f32 %v1405, 1.442695
    %v1408 = vpow.pop %v1407
    %v1409 = vmul.f32 %v1406, 1.442695
    %v1410 = vpow.pop %v1409
    %v1411 = vsel %vm217, %v1408, 0.0
    %1412 = vadd.xlane.f32.xlu0 %v1411
    %v1413 = vpop.xlane.xlu0 %1412
    %v1414 = vsel %vm217, %v1410, 0.0
    %1415 = vadd.xlane.f32.xlu0 %v1414
    %v1416 = vpop.xlane.xlu0 %1415
    %v1417 = vrcp.pop %v1413
    %v1418 = vrcp.pop %v1416
    %v1419 = vmul.f32 %v1408, %v1417
    %v1420 = vmul.f32 %v1410, %v1418
    %1421 = vrot.lane.b32.xlu0 %v202, 40
    %v1422 = vpop.permute.xlu0 %1421
    %v1425 = vsel %vm217, %v1419, 0
    %1427 = vmatprep.subr.mxu0 0.0
    %1428 = vmatpush1.msra.mxu0 %v1422
    %1429 = vmatprep.subr.mxu0 0.0
    %1430 = vmatpush1.msra.mxu0 0.0
    %1431 = vmatprep.subr.mxu0 0.0
    %1432 = vmatpush1.msra.mxu0 0.0
    %1433 = vmatprep.subr.mxu0 0.0
    %1434 = vmatpush1.msra.mxu0 0.0
    %1435 = vmatprep.subr.mxu0 0.0
    %1436 = vmatpush1.msra.mxu0 0.0
    %1437 = vmatprep.subr.mxu0 0.0
    %1438 = vmatpush1.msra.mxu0 0.0
    %1439 = vmatprep.subr.mxu0 0.0
    %1440 = vmatpush1.msra.mxu0 0.0
    %1441 = vmatprep.subr.mxu0 0.0
    %1442 = vmatpush1.msra.mxu0 0.0
    %1443 = vmatprep.subr.mxu0 0.0
    %1444 = vmatpush1.msra.mxu0 0.0
    %1445 = vmatprep.subr.mxu0 0.0
    %1446 = vmatpush1.msra.mxu0 0.0
    %1447 = vmatprep.subr.mxu0 0.0
    %1448 = vmatpush1.msra.mxu0 0.0
    %1449 = vmatprep.subr.mxu0 0.0
    %1450 = vmatpush1.msra.mxu0 0.0
    %1451 = vmatprep.subr.mxu0 0.0
    %1452 = vmatpush1.msra.mxu0 0.0
    %1453 = vmatprep.subr.mxu0 0.0
    %1454 = vmatpush1.msra.mxu0 0.0
    %1455 = vmatprep.subr.mxu0 0.0
    %1456 = vmatpush1.msra.mxu0 0.0
    %1457 = vmatprep.subr.mxu0 0.0
    %1458 = vmatpush1.msra.mxu0 0.0
    %1459 = vmatprep.subr.mxu0 0.0
    %1460 = vmatpush1.msra.mxu0 0.0
    %1461 = vmatprep.subr.mxu0 0.0
    %1462 = vmatpush1.msra.mxu0 0.0
    %1463 = vmatprep.subr.mxu0 0.0
    %1464 = vmatpush1.msra.mxu0 0.0
    %1465 = vmatprep.subr.mxu0 0.0
    %1466 = vmatpush1.msra.mxu0 0.0
    %1467 = vmatprep.subr.mxu0 0.0
    %1468 = vmatpush1.msra.mxu0 0.0
    %1469 = vmatprep.subr.mxu0 0.0
    %1470 = vmatpush1.msra.mxu0 0.0
    %1471 = vmatprep.subr.mxu0 0.0
    %1472 = vmatpush1.msra.mxu0 0.0
    %1473 = vmatprep.subr.mxu0 0.0
    %1474 = vmatpush1.msra.mxu0 0.0
    %1475 = vmatprep.subr.mxu0 0.0
    %1476 = vmatpush1.msra.mxu0 0.0
    %1477 = vmatprep.subr.mxu0 0.0
    %1478 = vmatpush1.msra.mxu0 0.0
    %1479 = vmatprep.subr.mxu0 0.0
    %1480 = vmatpush1.msra.mxu0 0.0
    %1481 = vmatprep.subr.mxu0 0.0
    %1482 = vmatpush1.msra.mxu0 0.0
    %1483 = vmatprep.subr.mxu0 0.0
    %1484 = vmatpush1.msra.mxu0 0.0
    %1485 = vmatprep.subr.mxu0 0.0
    %1486 = vmatpush1.msra.mxu0 0.0
    %1487 = vmatprep.subr.mxu0 0.0
    %1488 = vmatpush1.msra.mxu0 0.0
    %1489 = vmatprep.subr.mxu0 0.0
    %1490 = vmatpush1.msra.mxu0 0.0
    %1491 = vmatprep.mubr.f32.mxu0 0.0
    %1492 = vmatmul.mubr.f32.gmra.mrb[0].mxu0 %v1425
    %v1493 = vpop.f32.mrb[0].mxu0
    %v1494 = vadd.f32 0.0, %v1493
    %v1495 = vpop.f32.mrb[0].mxu0
    %1496 = vdwg.mxu0
    %1497 = vrot.lane.b32.xlu0 %v207, 40
    %v1498 = vpop.permute.xlu0 %1497
    %v1501 = vsel %vm217, %v1420, 0
    %1503 = vmatprep.subr.mxu0 0.0
    %1504 = vmatpush1.msra.mxu0 %v1498
    %1505 = vmatprep.subr.mxu0 0.0
    %1506 = vmatpush1.msra.mxu0 0.0
    %1507 = vmatprep.subr.mxu0 0.0
    %1508 = vmatpush1.msra.mxu0 0.0
    %1509 = vmatprep.subr.mxu0 0.0
    %1510 = vmatpush1.msra.mxu0 0.0
    %1511 = vmatprep.subr.mxu0 0.0
    %1512 = vmatpush1.msra.mxu0 0.0
    %1513 = vmatprep.subr.mxu0 0.0
    %1514 = vmatpush1.msra.mxu0 0.0
    %1515 = vmatprep.subr.mxu0 0.0
    %1516 = vmatpush1.msra.mxu0 0.0
    %1517 = vmatprep.subr.mxu0 0.0
    %1518 = vmatpush1.msra.mxu0 0.0
    %1519 = vmatprep.subr.mxu0 0.0
    %1520 = vmatpush1.msra.mxu0 0.0
    %1521 = vmatprep.subr.mxu0 0.0
    %1522 = vmatpush1.msra.mxu0 0.0
    %1523 = vmatprep.subr.mxu0 0.0
    %1524 = vmatpush1.msra.mxu0 0.0
    %1525 = vmatprep.subr.mxu0 0.0
    %1526 = vmatpush1.msra.mxu0 0.0
    %1527 = vmatprep.subr.mxu0 0.0
    %1528 = vmatpush1.msra.mxu0 0.0
    %1529 = vmatprep.subr.mxu0 0.0
    %1530 = vmatpush1.msra.mxu0 0.0
    %1531 = vmatprep.subr.mxu0 0.0
    %1532 = vmatpush1.msra.mxu0 0.0
    %1533 = vmatprep.subr.mxu0 0.0
    %1534 = vmatpush1.msra.mxu0 0.0
    %1535 = vmatprep.subr.mxu0 0.0
    %1536 = vmatpush1.msra.mxu0 0.0
    %1537 = vmatprep.subr.mxu0 0.0
    %1538 = vmatpush1.msra.mxu0 0.0
    %1539 = vmatprep.subr.mxu0 0.0
    %1540 = vmatpush1.msra.mxu0 0.0
    %1541 = vmatprep.subr.mxu0 0.0
    %1542 = vmatpush1.msra.mxu0 0.0
    %1543 = vmatprep.subr.mxu0 0.0
    %1544 = vmatpush1.msra.mxu0 0.0
    %1545 = vmatprep.subr.mxu0 0.0
    %1546 = vmatpush1.msra.mxu0 0.0
    %1547 = vmatprep.subr.mxu0 0.0
    %1548 = vmatpush1.msra.mxu0 0.0
    %1549 = vmatprep.subr.mxu0 0.0
    %1550 = vmatpush1.msra.mxu0 0.0
    %1551 = vmatprep.subr.mxu0 0.0
    %1552 = vmatpush1.msra.mxu0 0.0
    %1553 = vmatprep.subr.mxu0 0.0
    %1554 = vmatpush1.msra.mxu0 0.0
    %1555 = vmatprep.subr.mxu0 0.0
    %1556 = vmatpush1.msra.mxu0 0.0
    %1557 = vmatprep.subr.mxu0 0.0
    %1558 = vmatpush1.msra.mxu0 0.0
    %1559 = vmatprep.subr.mxu0 0.0
    %1560 = vmatpush1.msra.mxu0 0.0
    %1561 = vmatprep.subr.mxu0 0.0
    %1562 = vmatpush1.msra.mxu0 0.0
    %1563 = vmatprep.subr.mxu0 0.0
    %1564 = vmatpush1.msra.mxu0 0.0
    %1565 = vmatprep.subr.mxu0 0.0
    %1566 = vmatpush1.msra.mxu0 0.0
    %1567 = vmatprep.mubr.f32.mxu0 0.0
    %1568 = vmatmul.mubr.f32.gmra.mrb[0].mxu0 %v1501
    %v1569 = vpop.f32.mrb[0].mxu0
    %v1570 = vadd.f32 0.0, %v1569
    %v1571 = vpop.f32.mrb[0].mxu0
    %1572 = vdwg.mxu0
    %1575 = vrot.lane.b32.xlu0 %v1494, 24
    %v1576 = vpop.permute.xlu0 %1575
    %1577 = vrot.lane.b32.xlu0 %v1570, 24
    %v1578 = vpop.permute.xlu0 %1577
    %vm1581 = vcmask 261312
    %1582 = vst.msk [vmem:[#allocation2] sm:$0xff] %vm1581, %v1576
    %1583 = vst.msk [vmem:[#allocation2 + $0x8] sm:$0xff] %vm1581, %v1578
    %1584 = vst.msk [vmem:[#allocation10] sm:$0xff] %vm217, %v393
    %1585 = vst.msk [vmem:[#allocation10 + $0x8] sm:$0xff] %vm217, %v729
    %1586 = vst.msk [vmem:[#allocation10 + $0x10] sm:$0xff] %vm217, %v1074
    %1587 = vst.msk [vmem:[#allocation10 + $0x18] sm:$0xff] %vm217, %v1419
    %1588 = vst.msk [vmem:[#allocation10 + $0x20] sm:$0xff] %vm217, %v394
    %1589 = vst.msk [vmem:[#allocation10 + $0x28] sm:$0xff] %vm217, %v730
    %1590 = vst.msk [vmem:[#allocation10 + $0x30] sm:$0xff] %vm217, %v1075
    %1591 = vst.msk [vmem:[#allocation10 + $0x38] sm:$0xff] %vm217, %v1420
    %v1592 = vld [vmem:[#allocation2] sm:$0xff]
    %v1593 = vld [vmem:[#allocation2 + $0x8] sm:$0xff]
    %v1594 = vld [vmem:[%s4] sm:$0xff]
    %v1595 = vld [vmem:[%s4 + $0x8] sm:$0xff]
    %v1596 = vld [vmem:[%s4 + $0x10] sm:$0xff]
    %v1597 = vld [vmem:[%s4 + $0x18] sm:$0xff]
    %v1598 = vld [vmem:[%s5] sm:$0x1]
    %v1600 = vlaneseq
    %v1601 = vshrl.u32 %v1600, 7
    %v1602 = vsub.s32 0, %v1601
    %v1603 = vrot.slane %v1598, %v1602
    %v1606 = vsel %vm78, %v1592, 0
    %v1609 = vsel %vm78, %v1593, 0
    %1611 = vmatprep.subr.mxu0 0.0
    %1612 = vmatpush1.msra.mxu0 %v1594
    %1613 = vmatprep.subr.mxu0 0.0
    %1614 = vmatpush1.msra.mxu0 %v1595
    %1615 = vmatprep.subr.mxu0 0.0
    %1616 = vmatpush1.msra.mxu0 %v1596
    %1617 = vmatprep.subr.mxu0 0.0
    %1618 = vmatpush1.msra.mxu0 %v1597
    %1619 = vmatprep.subr.mxu0 0.0
    %1620 = vmatpush1.msra.mxu0 0.0
    %1621 = vmatprep.subr.mxu0 0.0
    %1622 = vmatpush1.msra.mxu0 0.0
    %1623 = vmatprep.subr.mxu0 0.0
    %1624 = vmatpush1.msra.mxu0 0.0
    %1625 = vmatprep.subr.mxu0 0.0
    %1626 = vmatpush1.msra.mxu0 0.0
    %1627 = vmatprep.subr.mxu0 0.0
    %1628 = vmatpush1.msra.mxu0 0.0
    %1629 = vmatprep.subr.mxu0 0.0
    %1630 = vmatpush1.msra.mxu0 0.0
    %1631 = vmatprep.subr.mxu0 0.0
    %1632 = vmatpush1.msra.mxu0 0.0
    %1633 = vmatprep.subr.mxu0 0.0
    %1634 = vmatpush1.msra.mxu0 0.0
    %1635 = vmatprep.subr.mxu0 0.0
    %1636 = vmatpush1.msra.mxu0 0.0
    %1637 = vmatprep.subr.mxu0 0.0
    %1638 = vmatpush1.msra.mxu0 0.0
    %1639 = vmatprep.subr.mxu0 0.0
    %1640 = vmatpush1.msra.mxu0 0.0
    %1641 = vmatprep.subr.mxu0 0.0
    %1642 = vmatpush1.msra.mxu0 0.0
    %1643 = vmatprep.subr.mxu0 0.0
    %1644 = vmatpush1.msra.mxu0 0.0
    %1645 = vmatprep.subr.mxu0 0.0
    %1646 = vmatpush1.msra.mxu0 0.0
    %1647 = vmatprep.subr.mxu0 0.0
    %1648 = vmatpush1.msra.mxu0 0.0
    %1649 = vmatprep.subr.mxu0 0.0
    %1650 = vmatpush1.msra.mxu0 0.0
    %1651 = vmatprep.subr.mxu0 0.0
    %1652 = vmatpush1.msra.mxu0 0.0
    %1653 = vmatprep.subr.mxu0 0.0
    %1654 = vmatpush1.msra.mxu0 0.0
    %1655 = vmatprep.subr.mxu0 0.0
    %1656 = vmatpush1.msra.mxu0 0.0
    %1657 = vmatprep.subr.mxu0 0.0
    %1658 = vmatpush1.msra.mxu0 0.0
    %1659 = vmatprep.subr.mxu0 0.0
    %1660 = vmatpush1.msra.mxu0 0.0
    %1661 = vmatprep.subr.mxu0 0.0
    %1662 = vmatpush1.msra.mxu0 0.0
    %1663 = vmatprep.subr.mxu0 0.0
    %1664 = vmatpush1.msra.mxu0 0.0
    %1665 = vmatprep.subr.mxu0 0.0
    %1666 = vmatpush1.msra.mxu0 0.0
    %1667 = vmatprep.subr.mxu0 0.0
    %1668 = vmatpush1.msra.mxu0 0.0
    %1669 = vmatprep.subr.mxu0 0.0
    %1670 = vmatpush1.msra.mxu0 0.0
    %1671 = vmatprep.subr.mxu0 0.0
    %1672 = vmatpush1.msra.mxu0 0.0
    %1673 = vmatprep.subr.mxu0 0.0
    %1674 = vmatpush1.msra.mxu0 0.0
    %1675 = vmatprep.mubr.f32.mxu0 0.0
    %1676 = vmatmul.mubr.f32.gmra.mrb[0].mxu0 %v1606
    %v1677 = vpop.f32.mrb[0].mxu0
    %v1678 = vadd.f32 %v1603, %v1677
    %v1679 = vpop.f32.mrb[0].mxu0
    %1680 = vmatprep.mubr.f32.mxu0 0.0
    %1681 = vmatmul.mubr.f32.gmra.mrb[0].mxu0 %v1609
    %v1682 = vpop.f32.mrb[0].mxu0
    %v1683 = vadd.f32 %v1603, %v1682
    %v1684 = vpop.f32.mrb[0].mxu0
    %1685 = vdwg.mxu0
    %v1686 = vadd.f32 %v75, %v1678
    %v1687 = vadd.f32 %v76, %v1683
    %v1688 = vsel %vm78, %v1686, 0.0
    %1689 = vadd.xlane.f32.xlu0 %v1688
    %v1690 = vpop.xlane.xlu0 %1689
    %v1691 = vsel %vm78, %v1687, 0.0
    %1692 = vadd.xlane.f32.xlu0 %v1691
    %v1693 = vpop.xlane.xlu0 %1692
    %v1694 = vmul.f32 %v1690, %v85
    %v1695 = vmul.f32 %v1693, %v85
    %v1696 = vsub.f32 %v1686, %v1694
    %v1697 = vsub.f32 %v1687, %v1695
    %v1698 = vmul.f32 %v1696, %v1696
    %v1699 = vmul.f32 %v1697, %v1697
    %v1700 = vsel %vm78, %v1698, 0.0
    %1701 = vadd.xlane.f32.xlu0 %v1700
    %v1702 = vpop.xlane.xlu0 %1701
    %v1703 = vsel %vm78, %v1699, 0.0
    %1704 = vadd.xlane.f32.xlu0 %v1703
    %v1705 = vpop.xlane.xlu0 %1704
    %v1706 = vmul.f32 %v1702, %v85
    %v1707 = vmul.f32 %v1705, %v85
    %v1708 = vadd.f32 %v1706, 1e-05
    %v1709 = vadd.f32 %v1707, 1e-05
    %v1710 = vrsqrt.pop %v1708
    %v1711 = vrsqrt.pop %v1709
    %v1712 = vmul.f32 %v1696, %v1710
    %v1713 = vmul.f32 %v1697, %v1711
    %v1714 = vlaneseq
    %v1715 = vshrl.u32 %v1714, 7
    %v1716 = vsub.s32 2, %v1715
    %v1717 = vrot.slane %v77, %v1716
    %v1718 = vmul.f32 %v1712, %v1717
    %v1719 = vmul.f32 %v1713, %v1717
    %v1720 = vlaneseq
    %v1721 = vshrl.u32 %v1720, 7
    %v1722 = vsub.s32 3, %v1721
    %v1723 = vrot.slane %v77, %v1722
    %v1724 = vadd.f32 %v1718, %v1723
    %v1725 = vadd.f32 %v1719, %v1723
    %v1726 = vld [vmem:[%s6] sm:$0xff]
    %v1727 = vld [vmem:[%s6 + $0x8] sm:$0xff]
    %v1728 = vld [vmem:[%s6 + $0x10] sm:$0xff]
    %v1729 = vld [vmem:[%s6 + $0x18] sm:$0xff]
    %v1731 = vsel %vm78, %v1724, 0
    %v1734 = vsel %vm78, %v1725, 0
    %1736 = vmatprep.subr.mxu0 0.0
    %1737 = vmatpush1.msra.mxu0 %v1726
    %1738 = vmatprep.subr.mxu0 0.0
    %1739 = vmatpush1.msra.mxu0 %v1727
    %1740 = vmatprep.subr.mxu0 0.0
    %1741 = vmatpush1.msra.mxu0 %v1728
    %1742 = vmatprep.subr.mxu0 0.0
    %1743 = vmatpush1.msra.mxu0 %v1729
    %1744 = vmatprep.subr.mxu0 0.0
    %1745 = vmatpush1.msra.mxu0 0.0
    %1746 = vmatprep.subr.mxu0 0.0
    %1747 = vmatpush1.msra.mxu0 0.0
    %1748 = vmatprep.subr.mxu0 0.0
    %1749 = vmatpush1.msra.mxu0 0.0
    %1750 = vmatprep.subr.mxu0 0.0
    %1751 = vmatpush1.msra.mxu0 0.0
    %1752 = vmatprep.subr.mxu0 0.0
    %1753 = vmatpush1.msra.mxu0 0.0
    %1754 = vmatprep.subr.mxu0 0.0
    %1755 = vmatpush1.msra.mxu0 0.0
    %1756 = vmatprep.subr.mxu0 0.0
    %1757 = vmatpush1.msra.mxu0 0.0
    %1758 = vmatprep.subr.mxu0 0.0
    %1759 = vmatpush1.msra.mxu0 0.0
    %1760 = vmatprep.subr.mxu0 0.0
    %1761 = vmatpush1.msra.mxu0 0.0
    %1762 = vmatprep.subr.mxu0 0.0
    %1763 = vmatpush1.msra.mxu0 0.0
    %1764 = vmatprep.subr.mxu0 0.0
    %1765 = vmatpush1.msra.mxu0 0.0
    %1766 = vmatprep.subr.mxu0 0.0
    %1767 = vmatpush1.msra.mxu0 0.0
    %1768 = vmatprep.subr.mxu0 0.0
    %1769 = vmatpush1.msra.mxu0 0.0
    %1770 = vmatprep.subr.mxu0 0.0
    %1771 = vmatpush1.msra.mxu0 0.0
    %1772 = vmatprep.subr.mxu0 0.0
    %1773 = vmatpush1.msra.mxu0 0.0
    %1774 = vmatprep.subr.mxu0 0.0
    %1775 = vmatpush1.msra.mxu0 0.0
    %1776 = vmatprep.subr.mxu0 0.0
    %1777 = vmatpush1.msra.mxu0 0.0
    %1778 = vmatprep.subr.mxu0 0.0
    %1779 = vmatpush1.msra.mxu0 0.0
    %1780 = vmatprep.subr.mxu0 0.0
    %1781 = vmatpush1.msra.mxu0 0.0
    %1782 = vmatprep.subr.mxu0 0.0
    %1783 = vmatpush1.msra.mxu0 0.0
    %1784 = vmatprep.subr.mxu0 0.0
    %1785 = vmatpush1.msra.mxu0 0.0
    %1786 = vmatprep.subr.mxu0 0.0
    %1787 = vmatpush1.msra.mxu0 0.0
    %1788 = vmatprep.subr.mxu0 0.0
    %1789 = vmatpush1.msra.mxu0 0.0
    %1790 = vmatprep.subr.mxu0 0.0
    %1791 = vmatpush1.msra.mxu0 0.0
    %1792 = vmatprep.subr.mxu0 0.0
    %1793 = vmatpush1.msra.mxu0 0.0
    %1794 = vmatprep.subr.mxu0 0.0
    %1795 = vmatpush1.msra.mxu0 0.0
    %1796 = vmatprep.subr.mxu0 0.0
    %1797 = vmatpush1.msra.mxu0 0.0
    %1798 = vmatprep.subr.mxu0 0.0
    %1799 = vmatpush1.msra.mxu0 0.0
    %1800 = vmatprep.mubr.f32.mxu0 0.0
    %1801 = vmatmul.mubr.f32.gmra.mrb[0].mxu0 %v1731
    %v1802 = vpop.f32.mrb[0].mxu0
    %v1803 = vadd.f32 0.0, %v1802
    %v1804 = vpop.f32.mrb[0].mxu0
    %1805 = vmatprep.mubr.f32.mxu0 0.0
    %1806 = vmatmul.mubr.f32.gmra.mrb[0].mxu0 %v1734
    %v1807 = vpop.f32.mrb[0].mxu0
    %v1808 = vadd.f32 0.0, %v1807
    %v1809 = vpop.f32.mrb[0].mxu0
    %1810 = vdwg.mxu0
    %v1811 = vxor.u32 %v1803, 2147483648
    %v1812 = vxor.u32 %v1808, 2147483648
    %v1813 = vmul.f32 %v1811, 1.442695
    %v1814 = vpow.pop %v1813
    %v1815 = vmul.f32 %v1812, 1.442695
    %v1816 = vpow.pop %v1815
    %v1817 = vadd.f32 %v1814, 1.0
    %v1818 = vadd.f32 %v1816, 1.0
    %v1819 = vrcp.pop %v1817
    %v1820 = vmul.f32 1.0, %v1819
    %v1821 = vrcp.pop %v1818
    %v1822 = vmul.f32 1.0, %v1821
    %v1823 = vmul.f32 %v1803, %v1820
    %v1824 = vmul.f32 %v1808, %v1822
    %1827 = vrot.lane.b32.xlu0 %v1803, 64
    %v1828 = vpop.permute.xlu0 %1827
    %1829 = vrot.lane.b32.xlu0 %v1808, 64
    %v1830 = vpop.permute.xlu0 %1829
    %v1833 = vmul.f32 %v1823, %v1828
    %v1834 = vmul.f32 %v1824, %v1830
    %v1835 = vld [vmem:[%s7] sm:$0xff]
    %v1836 = vld [vmem:[%s7 + $0x8] sm:$0xff]
    %v1837 = vld [vmem:[%s7 + $0x10] sm:$0xff]
    %v1838 = vld [vmem:[%s7 + $0x18] sm:$0xff]
    %v1839 = vld [vmem:[%s7 + $0x20] sm:$0xff]
    %v1840 = vld [vmem:[%s7 + $0x28] sm:$0xff]
    %v1841 = vld [vmem:[%s7 + $0x30] sm:$0xff]
    %v1842 = vld [vmem:[%s7 + $0x38] sm:$0xff]
    %vm1843 = vcmask 523264
    %v1845 = vsel %vm1843, %v1833, 0
    %v1848 = vsel %vm1843, %v1834, 0
    %1850 = vmatprep.subr.mxu0 0.0
    %1851 = vmatpush1.msra.mxu0 %v1835
    %1852 = vmatprep.subr.mxu0 0.0
    %1853 = vmatpush1.msra.mxu0 %v1836
    %1854 = vmatprep.subr.mxu0 0.0
    %1855 = vmatpush1.msra.mxu0 %v1837
    %1856 = vmatprep.subr.mxu0 0.0
    %1857 = vmatpush1.msra.mxu0 %v1838
    %1858 = vmatprep.subr.mxu0 0.0
    %1859 = vmatpush1.msra.mxu0 %v1839
    %1860 = vmatprep.subr.mxu0 0.0
    %1861 = vmatpush1.msra.mxu0 %v1840
    %1862 = vmatprep.subr.mxu0 0.0
    %1863 = vmatpush1.msra.mxu0 %v1841
    %1864 = vmatprep.subr.mxu0 0.0
    %1865 = vmatpush1.msra.mxu0 %v1842
    %1866 = vmatprep.subr.mxu0 0.0
    %1867 = vmatpush1.msra.mxu0 0.0
    %1868 = vmatprep.subr.mxu0 0.0
    %1869 = vmatpush1.msra.mxu0 0.0
    %1870 = vmatprep.subr.mxu0 0.0
    %1871 = vmatpush1.msra.mxu0 0.0
    %1872 = vmatprep.subr.mxu0 0.0
    %1873 = vmatpush1.msra.mxu0 0.0
    %1874 = vmatprep.subr.mxu0 0.0
    %1875 = vmatpush1.msra.mxu0 0.0
    %1876 = vmatprep.subr.mxu0 0.0
    %1877 = vmatpush1.msra.mxu0 0.0
    %1878 = vmatprep.subr.mxu0 0.0
    %1879 = vmatpush1.msra.mxu0 0.0
    %1880 = vmatprep.subr.mxu0 0.0
    %1881 = vmatpush1.msra.mxu0 0.0
    %1882 = vmatprep.subr.mxu0 0.0
    %1883 = vmatpush1.msra.mxu0 0.0
    %1884 = vmatprep.subr.mxu0 0.0
    %1885 = vmatpush1.msra.mxu0 0.0
    %1886 = vmatprep.subr.mxu0 0.0
    %1887 = vmatpush1.msra.mxu0 0.0
    %1888 = vmatprep.subr.mxu0 0.0
    %1889 = vmatpush1.msra.mxu0 0.0
    %1890 = vmatprep.subr.mxu0 0.0
    %1891 = vmatpush1.msra.mxu0 0.0
    %1892 = vmatprep.subr.mxu0 0.0
    %1893 = vmatpush1.msra.mxu0 0.0
    %1894 = vmatprep.subr.mxu0 0.0
    %1895 = vmatpush1.msra.mxu0 0.0
    %1896 = vmatprep.subr.mxu0 0.0
    %1897 = vmatpush1.msra.mxu0 0.0
    %1898 = vmatprep.subr.mxu0 0.0
    %1899 = vmatpush1.msra.mxu0 0.0
    %1900 = vmatprep.subr.mxu0 0.0
    %1901 = vmatpush1.msra.mxu0 0.0
    %1902 = vmatprep.subr.mxu0 0.0
    %1903 = vmatpush1.msra.mxu0 0.0
    %1904 = vmatprep.subr.mxu0 0.0
    %1905 = vmatpush1.msra.mxu0 0.0
    %1906 = vmatprep.subr.mxu0 0.0
    %1907 = vmatpush1.msra.mxu0 0.0
    %1908 = vmatprep.subr.mxu0 0.0
    %1909 = vmatpush1.msra.mxu0 0.0
    %1910 = vmatprep.subr.mxu0 0.0
    %1911 = vmatpush1.msra.mxu0 0.0
    %1912 = vmatprep.subr.mxu0 0.0
    %1913 = vmatpush1.msra.mxu0 0.0
    %1914 = vmatprep.mubr.f32.mxu0 0.0
    %1915 = vmatmul.mubr.f32.gmra.mrb[0].mxu0 %v1845
    %v1916 = vpop.f32.mrb[0].mxu0
    %v1917 = vadd.f32 0.0, %v1916
    %v1918 = vpop.f32.mrb[0].mxu0
    %1919 = vmatprep.mubr.f32.mxu0 0.0
    %1920 = vmatmul.mubr.f32.gmra.mrb[0].mxu0 %v1848
    %v1921 = vpop.f32.mrb[0].mxu0
    %v1922 = vadd.f32 0.0, %v1921
    %v1923 = vpop.f32.mrb[0].mxu0
    %1924 = vdwg.mxu0
    %v1925 = vadd.f32 %v1686, %v1917
    %v1926 = vadd.f32 %v1687, %v1922
    %1927 = vst.msk [vmem:[#allocation9] sm:$0xff] %vm78, %v1925
    %1928 = vst.msk [vmem:[#allocation9 + $0x8] sm:$0xff] %vm78, %v1926
    // Predicated region
    $region50: #{tpu_custom_call.1} parent=1 // pred_check
      _
    $region51: #{tpu_custom_call.1} parent=1 // pred_check_branch
      %1930 = sbr.rel (0) target = $region53
    $region52: #{tpu_custom_call.1} parent=1 // pred_region
      %s1932 = ssub.s32 256, 256
      %1933 = vsyncadd [#allocation5], %s1932
      %s1934 = sshll.u32 [#allocation9], 4
      %s1935 = int_to_ptr.vmem [resolvable:$true] %s1934
      %1940 = dma.vmem_to_hbm [thread:$0]  %s1935, 256, %s9, [#allocation5], 128, 128, 8
    $region53: #{tpu_custom_call.1} parent=1 // pred_fallthru
      _
    // Predicated region
    $region54: #{tpu_custom_call.1} parent=1 // pred_check
      _
    $region55: #{tpu_custom_call.1} parent=1 // pred_check_branch
      %1942 = sbr.rel (0) target = $region57
    $region56: #{tpu_custom_call.1} parent=1 // pred_region
      %s1944 = ssub.s32 1024, 1024
      %1945 = vsyncadd [#allocation11], %s1944
      %s1946 = sshll.u32 [#allocation10], 4
      %s1947 = int_to_ptr.vmem [resolvable:$true] %s1946
      %1952 = dma.vmem_to_hbm [thread:$0]  %s1947, 1024, %s10, [#allocation11], 128, 128, 8
    $region57: #{tpu_custom_call.1} parent=1 // pred_fallthru
      _
    // Predicated region
    $region58: #{tpu_custom_call.1} parent=1 // pred_check
      _
    $region59: #{tpu_custom_call.1} parent=1 // pred_check_branch
      %1954 = sbr.rel (0) target = $region61
    $region60: #{tpu_custom_call.1} parent=1 // pred_region
      %1955 = dma.done [#allocation5], 256
    $region61: #{tpu_custom_call.1} parent=1 // pred_fallthru
      _
    // Predicated region
    $region62: #{tpu_custom_call.1} parent=1 // pred_check
      _
    $region63: #{tpu_custom_call.1} parent=1 // pred_check_branch
      %1957 = sbr.rel (0) target = $region65
    $region64: #{tpu_custom_call.1} parent=1 // pred_region
      %1958 = dma.done [#allocation11], 1024
    $region65: #{tpu_custom_call.1} parent=1 // pred_fallthru
      _
    %1959 = vsyncpa [#allocation4], 1
    %1960 = vsyncpa [#allocation7], 1
    %1961 = vsyncpa [#allocation5], 1
    %1962 = vsyncpa [#allocation11], 1

</llo_original>
